<compile_context>
chip_gen: v5e
topology: v5e:2x2
jax: 0.10.0
libtpu: 0.0.40
codegen_flags: <defaults>
</compile_context>

<pallas_src>
import functools
import math

import jax
import jax.numpy as jnp
import numpy as np
from jax import lax
from jax.experimental import pallas as pl
from jax.experimental.pallas import tpu as pltpu

_EPS = 1e-12  # F.normalize default eps


# ----------------------------------------------------------------------------
# In-kernel math helpers
# ----------------------------------------------------------------------------
def _center_row_normalize_3d(x, scale=1.0):
    """Batched:  per-tensor (x - x.mean()) then F.normalize(p=2, dim=-1).

    x: (T, B, F) float32.  `scale` (static python float) is folded into the
    rsqrt factor (used to pre-apply 1/sqrt(temperature) to the mlp heads).
    """
    T, B, F = x.shape
    inv_count = jnp.float32(1.0 / (B * F))
    # per-tensor scalar mean, computed as two single-axis reductions
    total = jnp.sum(jnp.sum(x, axis=2, keepdims=True), axis=1, keepdims=True)  # (T,1,1)
    x = x - total * inv_count
    sumsq = jnp.sum(x * x, axis=2, keepdims=True)                               # (T,B,1)
    # 1/sqrt(max(sumsq, eps^2)) == 1/max(||x||, eps)  -> EUP rsqrt, no divide.
    factor = lax.rsqrt(jnp.maximum(sumsq, jnp.float32(_EPS * _EPS)))
    if scale != 1.0:
        factor = factor * jnp.float32(scale)
    return x * factor


# ----------------------------------------------------------------------------
# Single fused kernel: 3 packed slabs in, one scalar out (SMEM)
# ----------------------------------------------------------------------------
def _fused_loss_kernel(lat_ref, rec_ref, mlp_ref, out_ref, *,
                       temperature, batch_size):
    f32 = jnp.float32
    B = batch_size

    # ---- orthogonal losses (batched over the 3 modality pairs) -----------
    # lat slab order: [shared1, shared2, shared3, specific1, specific2, specific3]
    latn = _center_row_normalize_3d(lat_ref[...])                 # (6,B,Dl)
    Dl = latn.shape[2]
    prod = latn[0:3] * latn[3:6]                                  # (3,B,Dl)
    # sum of the three per-tensor means == full sum / (B*Dl)
    ortho = jnp.sum(prod) * f32(1.0 / (B * Dl))

    # ---- contrastive losses: one Gram matrix for all three pairs ----------
    inv_sqrt_t = 1.0 / math.sqrt(temperature)
    mlpn = _center_row_normalize_3d(mlp_ref[...], scale=inv_sqrt_t)  # (3,B,Dm), pre-scaled
    z0, z1, z2 = mlpn[0], mlpn[1], mlpn[2]                        # (B,Dm) each
    Z = jnp.concatenate([z0, z1, z2], axis=0)                     # (3B,Dm)
    # Contract both operands on the lane dim -> MXU without an XLU transpose.
    # G[i,j] = z_i . z_j / T   (since each z is already scaled by 1/sqrt(T)).
    G = lax.dot_general(Z, Z, dimension_numbers=(((1,), (1,)), ((), ())),
                        preferred_element_type=f32)               # (3B,3B)

    n3 = 3 * B
    # Hoisted iotas / masks (reused by all three pairs; JAX does not CSE them).
    row_idx = lax.broadcasted_iota(jnp.int32, (n3, 1), 0)
    col_idx = lax.broadcasted_iota(jnp.int32, (1, n3), 1)
    not_diag = row_idx != col_idx                                 # (3B,3B)
    rmask = [(row_idx >= t * B) & (row_idx < (t + 1) * B) for t in range(3)]
    cmask = [(col_idx >= t * B) & (col_idx < (t + 1) * B) for t in range(3)]

    neg_big = f32(-1e30)
    inv_n = f32(1.0 / (2 * B))

    def _pair_loss(a, b, za, zb):
        row_in = rmask[a] | rmask[b]                              # (3B,1)
        valid = (row_in & (cmask[a] | cmask[b])) & not_diag       # (3B,3B)
        g = jnp.where(valid, G, neg_big)
        m = jnp.max(g, axis=1, keepdims=True)                     # (3B,1)
        s = jnp.sum(jnp.exp(g - m), axis=1, keepdims=True)
        lse = jnp.log(s) + m
        lse_sum = jnp.sum(jnp.where(row_in, lse, f32(0.0)))
        # positives as a row-wise dot (already includes the 1/T factor)
        pos_sum = jnp.sum(za * zb)
        return (lse_sum - f32(2.0) * pos_sum) * inv_n

    contrast = (_pair_loss(0, 1, z0, z1)
                + _pair_loss(0, 2, z0, z2)
                + _pair_loss(1, 2, z1, z2))

    # ---- reconstruction losses (batched; ori normalized once) ------------
    # rec slab order: [sh1_rec, sh2_rec, sh3_rec, sp1_rec, sp2_rec, sp3_rec,
    #                  ori1, ori2, ori3]
    recn = _center_row_normalize_3d(rec_ref[...])                 # (9,B,Di)
    orin = recn[6:9]                                              # (3,B,Di)
    d_sh = recn[0:3] - orin
    d_sp = recn[3:6] - orin
    ss_sh = jnp.sum(jnp.sum(d_sh * d_sh, axis=2, keepdims=True),
                    axis=1, keepdims=True)                        # (3,1,1)
    ss_sp = jnp.sum(jnp.sum(d_sp * d_sp, axis=2, keepdims=True),
                    axis=1, keepdims=True)
    recon = jnp.sum(jnp.sqrt(ss_sh)) + jnp.sum(jnp.sqrt(ss_sp))

    out_ref[0] = ortho + contrast + f32(0.7) * recon


def shared_and_specific_loss(params):
    """Mirrors SharedAndSpecificLoss.forward; one fused Pallas kernel."""
    (*tensors, temperature, batch_size) = params
    assert len(tensors) == 18
    (sh1, sh2, sh3, sp1, sp2, sp3,
     rsh1, rsh2, rsh3, rsp1, rsp2, rsp3,
     o1, o2, o3, m1, m2, m3) = tensors

    f32 = jnp.float32
    # Pack the 18 operands into 3 shape-grouped slabs -> 3 DMAs instead of 18.
    lat = jnp.stack([sh1, sh2, sh3, sp1, sp2, sp3]).astype(f32)        # (6,B,Dl)
    rec = jnp.stack([rsh1, rsh2, rsh3, rsp1, rsp2, rsp3,
                     o1, o2, o3]).astype(f32)                          # (9,B,Di)
    mlp = jnp.stack([m1, m2, m3]).astype(f32)                          # (3,B,Dm)

    B = lat.shape[1]
    assert int(batch_size) == B, "batch_size must match the tensor row count"
    Dm = mlp.shape[2]

    kernel = functools.partial(
        _fused_loss_kernel,
        temperature=float(temperature),
        batch_size=B,
    )

    n_elems = int(lat.size + rec.size + mlp.size)
    bytes_accessed = n_elems * 4 + 4
    flops = int(2 * (3 * B) * Dm * (3 * B)          # Gram matmul
                + 30 * n_elems                      # elementwise / reductions
                + 3 * 6 * (3 * B) * (3 * B))        # per-pair masking + LSE
    transcendentals = int(3 * (3 * B) * (3 * B)     # exps
                          + 18 * B + 3 * 3 * B + 6)  # rsqrt / log / sqrt

    vmem_spec = pl.BlockSpec(memory_space=pltpu.MemorySpace.VMEM)
    out = pl.pallas_call(
        kernel,
        out_shape=jax.ShapeDtypeStruct((1,), jnp.float32),
        in_specs=[vmem_spec, vmem_spec, vmem_spec],
        out_specs=pl.BlockSpec(memory_space=pltpu.MemorySpace.SMEM),
        compiler_params=pltpu.CompilerParams(vmem_limit_bytes=32 * 1024 * 1024),
        cost_estimate=pl.CostEstimate(flops=flops,
                                      transcendentals=transcendentals,
                                      bytes_accessed=bytes_accessed),
    )(lat, rec, mlp)
    return out[0]


# ----------------------------------------------------------------------------
# Pure-JAX reference (PyTorch-style formulation) for a numerical sanity check
# ----------------------------------------------------------------------------
def _ref_center_norm(x):
    x = x - jnp.mean(x)
    norm = jnp.sqrt(jnp.sum(x * x, axis=1, keepdims=True))
    return x / jnp.maximum(norm, _EPS)


def _ref_instance_loss(z1, z2, temperature, batch_size):
    n = 2 * batch_size
    z = jnp.concatenate([z1, z2], axis=0)
    sim = jnp.dot(z, z.T) / temperature
    row = jnp.arange(n)[:, None]
    col = jnp.arange(n)[None, :]
    sim_nd = jnp.where(row == col, -1e30, sim)
    lse = jax.scipy.special.logsumexp(sim_nd, axis=1)
    pos_mask = (col == row + batch_size) | (col == row - batch_size)
    pos = jnp.sum(jnp.where(pos_mask, sim, 0.0), axis=1)
    return jnp.sum(lse - pos) / n


def _ref_loss(params):
    (sh1, sh2, sh3, sp1, sp2, sp3,
     rsh1, rsh2, rsh3, rsp1, rsp2, rsp3,
     o1, o2, o3, m1, m2, m3, temperature, batch_size) = params

    def ortho(a, b):
        return jnp.mean(_ref_center_norm(a) * _ref_center_norm(b))

    def recon(r, o):
        d = _ref_center_norm(r) - _ref_center_norm(o)
        return jnp.sqrt(jnp.sum(d * d))

    def contrast(a, b):
        return _ref_instance_loss(_ref_center_norm(a), _ref_center_norm(b),
                                  temperature, batch_size)

    ortho_all = ortho(sh1, sp1) + ortho(sh2, sp2) + ortho(sh3, sp3)
    contrast_all = contrast(m1, m2) + contrast(m1, m3) + contrast(m2, m3)
    recon_all = (recon(rsh1, o1) + recon(rsp1, o1)
                 + recon(rsh2, o2) + recon(rsp2, o2)
                 + recon(rsh3, o3) + recon(rsp3, o3))
    return ortho_all + contrast_all + 0.7 * recon_all


if __name__ == "__main__":
    batch_size = 8       # rows of every 2-D tensor
    latent_dim = 32      # shared/specific embedding width
    mlp_dim = 32         # projection head width
    input_dim = 64       # original-omic feature width (rec / ori)
    temperature = 0.5

    key = jax.random.PRNGKey(0)
    keys = jax.random.split(key, 18)

    def rnd(k, shape):
        return jax.random.normal(k, shape, dtype=jnp.float32)

    shared_outputs = [rnd(keys[i], (batch_size, latent_dim)) for i in range(3)]
    specific_outputs = [rnd(keys[3 + i], (batch_size, latent_dim)) for i in range(3)]
    shared_recs = [rnd(keys[6 + i], (batch_size, input_dim)) for i in range(3)]
    specific_recs = [rnd(keys[9 + i], (batch_size, input_dim)) for i in range(3)]
    oris = [rnd(keys[12 + i], (batch_size, input_dim)) for i in range(3)]
    shared_mlps = [rnd(keys[15 + i], (batch_size, mlp_dim)) for i in range(3)]

    params = (
        shared_outputs[0], shared_outputs[1], shared_outputs[2],
        specific_outputs[0], specific_outputs[1], specific_outputs[2],
        shared_recs[0], shared_recs[1], shared_recs[2],
        specific_recs[0], specific_recs[1], specific_recs[2],
        oris[0], oris[1], oris[2],
        shared_mlps[0], shared_mlps[1], shared_mlps[2],
        temperature, batch_size,
    )

    loss_total = shared_and_specific_loss(params)
    jax.block_until_ready(loss_total)

    ref = _ref_loss(params)
    jax.block_until_ready(ref)
    np.testing.assert_allclose(np.asarray(loss_total), np.asarray(ref),
                               rtol=1e-4, atol=1e-4)

    print("KERNEL_OK")
</pallas_src>

<mosaic_0001>
module attributes {stable_mosaic.version = 11 : i64} {
  func.func @_fused_loss_kernel(%arg0: memref<6x8x32xf32, #tpu.memory_space<vmem>>, %arg1: memref<9x8x64xf32, #tpu.memory_space<vmem>>, %arg2: memref<3x8x32xf32, #tpu.memory_space<vmem>>, %arg3: memref<1xf32, #tpu.memory_space<smem>>) attributes {dimension_semantics = [], scalar_prefetch = 0 : i64, scratch_operands = 0 : i64, tpu.core_type = #tpu.core_type<tc>} {
    %c0 = arith.constant 0 : index
    %c0_0 = arith.constant 0 : index
    %c0_1 = arith.constant 0 : index
    %0 = vector.load %arg0[%c0, %c0_0, %c0_1] : memref<6x8x32xf32, #tpu.memory_space<vmem>>, vector<6x8x32xf32>
    %cst = arith.constant dense<0.000000e+00> : vector<6x8xf32>
    %1 = vector.multi_reduction <add>, %0, %cst [2] : vector<6x8x32xf32> to vector<6x8xf32>
    %2 = vector.shape_cast %1 : vector<6x8xf32> to vector<6x8x1xf32>
    %cst_2 = arith.constant dense<0.000000e+00> : vector<6x1xf32>
    %3 = vector.multi_reduction <add>, %2, %cst_2 [1] : vector<6x8x1xf32> to vector<6x1xf32>
    %4 = vector.shape_cast %3 : vector<6x1xf32> to vector<6x1x1xf32>
    %cst_3 = arith.constant 3.906250e-03 : f32
    %5 = vector.broadcast %cst_3 : f32 to vector<6x1x1xf32>
    %6 = arith.mulf %4, %5 : vector<6x1x1xf32>
    %7 = vector.broadcast %6 : vector<6x1x1xf32> to vector<6x8x32xf32>
    %8 = arith.subf %0, %7 : vector<6x8x32xf32>
    %9 = arith.mulf %8, %8 : vector<6x8x32xf32>
    %cst_4 = arith.constant dense<0.000000e+00> : vector<6x8xf32>
    %10 = vector.multi_reduction <add>, %9, %cst_4 [2] : vector<6x8x32xf32> to vector<6x8xf32>
    %11 = vector.shape_cast %10 : vector<6x8xf32> to vector<6x8x1xf32>
    %cst_5 = arith.constant 1.000000e-24 : f32
    %12 = vector.broadcast %cst_5 : f32 to vector<6x8x1xf32>
    %13 = arith.maximumf %11, %12 : vector<6x8x1xf32>
    %14 = math.rsqrt %13 : vector<6x8x1xf32>
    %15 = vector.broadcast %14 : vector<6x8x1xf32> to vector<6x8x32xf32>
    %16 = arith.mulf %8, %15 : vector<6x8x32xf32>
    %17 = vector.extract_strided_slice %16 {offsets = [0, 0, 0], sizes = [3, 8, 32], strides = [1, 1, 1]} : vector<6x8x32xf32> to vector<3x8x32xf32>
    %18 = vector.extract_strided_slice %16 {offsets = [3, 0, 0], sizes = [3, 8, 32], strides = [1, 1, 1]} : vector<6x8x32xf32> to vector<3x8x32xf32>
    %19 = arith.mulf %17, %18 : vector<3x8x32xf32>
    %20 = vector.shape_cast %19 : vector<3x8x32xf32> to vector<1x3x8x32xf32>
    %cst_6 = arith.constant dense<0.000000e+00> : vector<1xf32>
    %21 = vector.multi_reduction <add>, %20, %cst_6 [1, 2, 3] : vector<1x3x8x32xf32> to vector<1xf32>
    %22 = vector.shape_cast %21 : vector<1xf32> to vector<1x1x1x1xf32>
    %23 = vector.extract %22[0, 0, 0, 0] : f32 from vector<1x1x1x1xf32>
    %cst_7 = arith.constant 3.906250e-03 : f32
    %24 = arith.mulf %23, %cst_7 : f32
    %c0_8 = arith.constant 0 : index
    %c0_9 = arith.constant 0 : index
    %c0_10 = arith.constant 0 : index
    %25 = vector.load %arg2[%c0_8, %c0_9, %c0_10] : memref<3x8x32xf32, #tpu.memory_space<vmem>>, vector<3x8x32xf32>
    %cst_11 = arith.constant dense<0.000000e+00> : vector<3x8xf32>
    %26 = vector.multi_reduction <add>, %25, %cst_11 [2] : vector<3x8x32xf32> to vector<3x8xf32>
    %27 = vector.shape_cast %26 : vector<3x8xf32> to vector<3x8x1xf32>
    %cst_12 = arith.constant dense<0.000000e+00> : vector<3x1xf32>
    %28 = vector.multi_reduction <add>, %27, %cst_12 [1] : vector<3x8x1xf32> to vector<3x1xf32>
    %29 = vector.shape_cast %28 : vector<3x1xf32> to vector<3x1x1xf32>
    %cst_13 = arith.constant 3.906250e-03 : f32
    %30 = vector.broadcast %cst_13 : f32 to vector<3x1x1xf32>
    %31 = arith.mulf %29, %30 : vector<3x1x1xf32>
    %32 = vector.broadcast %31 : vector<3x1x1xf32> to vector<3x8x32xf32>
    %33 = arith.subf %25, %32 : vector<3x8x32xf32>
    %34 = arith.mulf %33, %33 : vector<3x8x32xf32>
    %cst_14 = arith.constant dense<0.000000e+00> : vector<3x8xf32>
    %35 = vector.multi_reduction <add>, %34, %cst_14 [2] : vector<3x8x32xf32> to vector<3x8xf32>
    %36 = vector.shape_cast %35 : vector<3x8xf32> to vector<3x8x1xf32>
    %cst_15 = arith.constant 1.000000e-24 : f32
    %37 = vector.broadcast %cst_15 : f32 to vector<3x8x1xf32>
    %38 = arith.maximumf %36, %37 : vector<3x8x1xf32>
    %39 = math.rsqrt %38 : vector<3x8x1xf32>
    %cst_16 = arith.constant 1.41421354 : f32
    %40 = vector.broadcast %cst_16 : f32 to vector<3x8x1xf32>
    %41 = arith.mulf %39, %40 : vector<3x8x1xf32>
    %42 = vector.broadcast %41 : vector<3x8x1xf32> to vector<3x8x32xf32>
    %43 = arith.mulf %33, %42 : vector<3x8x32xf32>
    %44 = vector.extract_strided_slice %43 {offsets = [0, 0, 0], sizes = [1, 8, 32], strides = [1, 1, 1]} : vector<3x8x32xf32> to vector<1x8x32xf32>
    %45 = vector.shape_cast %44 : vector<1x8x32xf32> to vector<8x32xf32>
    %46 = vector.extract_strided_slice %43 {offsets = [1, 0, 0], sizes = [1, 8, 32], strides = [1, 1, 1]} : vector<3x8x32xf32> to vector<1x8x32xf32>
    %47 = vector.shape_cast %46 : vector<1x8x32xf32> to vector<8x32xf32>
    %48 = vector.extract_strided_slice %43 {offsets = [2, 0, 0], sizes = [1, 8, 32], strides = [1, 1, 1]} : vector<3x8x32xf32> to vector<1x8x32xf32>
    %49 = vector.shape_cast %48 : vector<1x8x32xf32> to vector<8x32xf32>
    %50 = tpu.concatenate %45, %47, %49 in 0 : vector<8x32xf32>, vector<8x32xf32>, vector<8x32xf32> -> vector<24x32xf32>
    %cst_17 = arith.constant dense<0.000000e+00> : vector<24x24xf32>
    %51 = tpu.matmul %50, %50, %cst_17 {dimension_numbers = #tpu.dot_dimension_numbers<[1], [1], [0], [0], [0, 0, 1, 0], [], []>} : vector<24x32xf32>, vector<24x32xf32>, vector<24x24xf32> -> vector<24x24xf32>
    %52 = tpu.iota {dimensions = array<i32: 0>} : vector<24x1xi32>
    %53 = tpu.iota {dimensions = array<i32: 1>} : vector<1x24xi32>
    %54 = vector.broadcast %52 : vector<24x1xi32> to vector<24x24xi32>
    %55 = vector.broadcast %53 : vector<1x24xi32> to vector<24x24xi32>
    %56 = arith.cmpi ne, %54, %55 : vector<24x24xi32>
    %c0_i32 = arith.constant 0 : i32
    %57 = vector.broadcast %c0_i32 : i32 to vector<24x1xi32>
    %58 = arith.cmpi sge, %52, %57 : vector<24x1xi32>
    %c8_i32 = arith.constant 8 : i32
    %59 = vector.broadcast %c8_i32 : i32 to vector<24x1xi32>
    %60 = arith.cmpi slt, %52, %59 : vector<24x1xi32>
    %61 = arith.andi %58, %60 : vector<24x1xi1>
    %c8_i32_18 = arith.constant 8 : i32
    %62 = vector.broadcast %c8_i32_18 : i32 to vector<24x1xi32>
    %63 = arith.cmpi sge, %52, %62 : vector<24x1xi32>
    %c16_i32 = arith.constant 16 : i32
    %64 = vector.broadcast %c16_i32 : i32 to vector<24x1xi32>
    %65 = arith.cmpi slt, %52, %64 : vector<24x1xi32>
    %66 = arith.andi %63, %65 : vector<24x1xi1>
    %c16_i32_19 = arith.constant 16 : i32
    %67 = vector.broadcast %c16_i32_19 : i32 to vector<24x1xi32>
    %68 = arith.cmpi sge, %52, %67 : vector<24x1xi32>
    %c24_i32 = arith.constant 24 : i32
    %69 = vector.broadcast %c24_i32 : i32 to vector<24x1xi32>
    %70 = arith.cmpi slt, %52, %69 : vector<24x1xi32>
    %71 = arith.andi %68, %70 : vector<24x1xi1>
    %c0_i32_20 = arith.constant 0 : i32
    %72 = vector.broadcast %c0_i32_20 : i32 to vector<1x24xi32>
    %73 = arith.cmpi sge, %53, %72 : vector<1x24xi32>
    %c8_i32_21 = arith.constant 8 : i32
    %74 = vector.broadcast %c8_i32_21 : i32 to vector<1x24xi32>
    %75 = arith.cmpi slt, %53, %74 : vector<1x24xi32>
    %76 = arith.andi %73, %75 : vector<1x24xi1>
    %c8_i32_22 = arith.constant 8 : i32
    %77 = vector.broadcast %c8_i32_22 : i32 to vector<1x24xi32>
    %78 = arith.cmpi sge, %53, %77 : vector<1x24xi32>
    %c16_i32_23 = arith.constant 16 : i32
    %79 = vector.broadcast %c16_i32_23 : i32 to vector<1x24xi32>
    %80 = arith.cmpi slt, %53, %79 : vector<1x24xi32>
    %81 = arith.andi %78, %80 : vector<1x24xi1>
    %c16_i32_24 = arith.constant 16 : i32
    %82 = vector.broadcast %c16_i32_24 : i32 to vector<1x24xi32>
    %83 = arith.cmpi sge, %53, %82 : vector<1x24xi32>
    %c24_i32_25 = arith.constant 24 : i32
    %84 = vector.broadcast %c24_i32_25 : i32 to vector<1x24xi32>
    %85 = arith.cmpi slt, %53, %84 : vector<1x24xi32>
    %86 = arith.andi %83, %85 : vector<1x24xi1>
    %87 = arith.ori %61, %66 : vector<24x1xi1>
    %88 = arith.ori %76, %81 : vector<1x24xi1>
    %89 = vector.broadcast %87 : vector<24x1xi1> to vector<24x24xi1>
    %90 = vector.broadcast %88 : vector<1x24xi1> to vector<24x24xi1>
    %91 = arith.andi %89, %90 : vector<24x24xi1>
    %92 = arith.andi %91, %56 : vector<24x24xi1>
    %cst_26 = arith.constant -1.000000e+30 : f32
    %93 = vector.broadcast %cst_26 : f32 to vector<24x24xf32>
    %94 = arith.select %92, %51, %93 : vector<24x24xi1>, vector<24x24xf32>
    %cst_27 = arith.constant dense<0xFF800000> : vector<24xf32>
    %95 = vector.multi_reduction <maximumf>, %94, %cst_27 [1] : vector<24x24xf32> to vector<24xf32>
    %96 = vector.shape_cast %95 : vector<24xf32> to vector<24x1xf32>
    %97 = vector.broadcast %96 : vector<24x1xf32> to vector<24x24xf32>
    %98 = arith.subf %94, %97 : vector<24x24xf32>
    %99 = math.exp %98 : vector<24x24xf32>
    %cst_28 = arith.constant dense<0.000000e+00> : vector<24xf32>
    %100 = vector.multi_reduction <add>, %99, %cst_28 [1] : vector<24x24xf32> to vector<24xf32>
    %101 = vector.shape_cast %100 : vector<24xf32> to vector<24x1xf32>
    %102 = math.log %101 : vector<24x1xf32>
    %103 = arith.addf %102, %96 : vector<24x1xf32>
    %cst_29 = arith.constant 0.000000e+00 : f32
    %104 = vector.broadcast %cst_29 : f32 to vector<24x1xf32>
    %105 = arith.select %87, %103, %104 : vector<24x1xi1>, vector<24x1xf32>
    %106 = vector.shape_cast %105 : vector<24x1xf32> to vector<1x24x1xf32>
    %cst_30 = arith.constant dense<0.000000e+00> : vector<1xf32>
    %107 = vector.multi_reduction <add>, %106, %cst_30 [1, 2] : vector<1x24x1xf32> to vector<1xf32>
    %108 = vector.shape_cast %107 : vector<1xf32> to vector<1x1x1xf32>
    %109 = vector.extract %108[0, 0, 0] : f32 from vector<1x1x1xf32>
    %110 = arith.mulf %45, %47 : vector<8x32xf32>
    %111 = vector.shape_cast %110 : vector<8x32xf32> to vector<1x8x32xf32>
    %cst_31 = arith.constant dense<0.000000e+00> : vector<1xf32>
    %112 = vector.multi_reduction <add>, %111, %cst_31 [1, 2] : vector<1x8x32xf32> to vector<1xf32>
    %113 = vector.shape_cast %112 : vector<1xf32> to vector<1x1x1xf32>
    %114 = vector.extract %113[0, 0, 0] : f32 from vector<1x1x1xf32>
    %cst_32 = arith.constant 2.000000e+00 : f32
    %115 = arith.mulf %cst_32, %114 : f32
    %116 = arith.subf %109, %115 : f32
    %cst_33 = arith.constant 6.250000e-02 : f32
    %117 = arith.mulf %116, %cst_33 : f32
    %118 = arith.ori %61, %71 : vector<24x1xi1>
    %119 = arith.ori %76, %86 : vector<1x24xi1>
    %120 = vector.broadcast %118 : vector<24x1xi1> to vector<24x24xi1>
    %121 = vector.broadcast %119 : vector<1x24xi1> to vector<24x24xi1>
    %122 = arith.andi %120, %121 : vector<24x24xi1>
    %123 = arith.andi %122, %56 : vector<24x24xi1>
    %cst_34 = arith.constant -1.000000e+30 : f32
    %124 = vector.broadcast %cst_34 : f32 to vector<24x24xf32>
    %125 = arith.select %123, %51, %124 : vector<24x24xi1>, vector<24x24xf32>
    %cst_35 = arith.constant dense<0xFF800000> : vector<24xf32>
    %126 = vector.multi_reduction <maximumf>, %125, %cst_35 [1] : vector<24x24xf32> to vector<24xf32>
    %127 = vector.shape_cast %126 : vector<24xf32> to vector<24x1xf32>
    %128 = vector.broadcast %127 : vector<24x1xf32> to vector<24x24xf32>
    %129 = arith.subf %125, %128 : vector<24x24xf32>
    %130 = math.exp %129 : vector<24x24xf32>
    %cst_36 = arith.constant dense<0.000000e+00> : vector<24xf32>
    %131 = vector.multi_reduction <add>, %130, %cst_36 [1] : vector<24x24xf32> to vector<24xf32>
    %132 = vector.shape_cast %131 : vector<24xf32> to vector<24x1xf32>
    %133 = math.log %132 : vector<24x1xf32>
    %134 = arith.addf %133, %127 : vector<24x1xf32>
    %cst_37 = arith.constant 0.000000e+00 : f32
    %135 = vector.broadcast %cst_37 : f32 to vector<24x1xf32>
    %136 = arith.select %118, %134, %135 : vector<24x1xi1>, vector<24x1xf32>
    %137 = vector.shape_cast %136 : vector<24x1xf32> to vector<1x24x1xf32>
    %cst_38 = arith.constant dense<0.000000e+00> : vector<1xf32>
    %138 = vector.multi_reduction <add>, %137, %cst_38 [1, 2] : vector<1x24x1xf32> to vector<1xf32>
    %139 = vector.shape_cast %138 : vector<1xf32> to vector<1x1x1xf32>
    %140 = vector.extract %139[0, 0, 0] : f32 from vector<1x1x1xf32>
    %141 = arith.mulf %45, %49 : vector<8x32xf32>
    %142 = vector.shape_cast %141 : vector<8x32xf32> to vector<1x8x32xf32>
    %cst_39 = arith.constant dense<0.000000e+00> : vector<1xf32>
    %143 = vector.multi_reduction <add>, %142, %cst_39 [1, 2] : vector<1x8x32xf32> to vector<1xf32>
    %144 = vector.shape_cast %143 : vector<1xf32> to vector<1x1x1xf32>
    %145 = vector.extract %144[0, 0, 0] : f32 from vector<1x1x1xf32>
    %cst_40 = arith.constant 2.000000e+00 : f32
    %146 = arith.mulf %cst_40, %145 : f32
    %147 = arith.subf %140, %146 : f32
    %cst_41 = arith.constant 6.250000e-02 : f32
    %148 = arith.mulf %147, %cst_41 : f32
    %149 = arith.addf %117, %148 : f32
    %150 = arith.ori %66, %71 : vector<24x1xi1>
    %151 = arith.ori %81, %86 : vector<1x24xi1>
    %152 = vector.broadcast %150 : vector<24x1xi1> to vector<24x24xi1>
    %153 = vector.broadcast %151 : vector<1x24xi1> to vector<24x24xi1>
    %154 = arith.andi %152, %153 : vector<24x24xi1>
    %155 = arith.andi %154, %56 : vector<24x24xi1>
    %cst_42 = arith.constant -1.000000e+30 : f32
    %156 = vector.broadcast %cst_42 : f32 to vector<24x24xf32>
    %157 = arith.select %155, %51, %156 : vector<24x24xi1>, vector<24x24xf32>
    %cst_43 = arith.constant dense<0xFF800000> : vector<24xf32>
    %158 = vector.multi_reduction <maximumf>, %157, %cst_43 [1] : vector<24x24xf32> to vector<24xf32>
    %159 = vector.shape_cast %158 : vector<24xf32> to vector<24x1xf32>
    %160 = vector.broadcast %159 : vector<24x1xf32> to vector<24x24xf32>
    %161 = arith.subf %157, %160 : vector<24x24xf32>
    %162 = math.exp %161 : vector<24x24xf32>
    %cst_44 = arith.constant dense<0.000000e+00> : vector<24xf32>
    %163 = vector.multi_reduction <add>, %162, %cst_44 [1] : vector<24x24xf32> to vector<24xf32>
    %164 = vector.shape_cast %163 : vector<24xf32> to vector<24x1xf32>
    %165 = math.log %164 : vector<24x1xf32>
    %166 = arith.addf %165, %159 : vector<24x1xf32>
    %cst_45 = arith.constant 0.000000e+00 : f32
    %167 = vector.broadcast %cst_45 : f32 to vector<24x1xf32>
    %168 = arith.select %150, %166, %167 : vector<24x1xi1>, vector<24x1xf32>
    %169 = vector.shape_cast %168 : vector<24x1xf32> to vector<1x24x1xf32>
    %cst_46 = arith.constant dense<0.000000e+00> : vector<1xf32>
    %170 = vector.multi_reduction <add>, %169, %cst_46 [1, 2] : vector<1x24x1xf32> to vector<1xf32>
    %171 = vector.shape_cast %170 : vector<1xf32> to vector<1x1x1xf32>
    %172 = vector.extract %171[0, 0, 0] : f32 from vector<1x1x1xf32>
    %173 = arith.mulf %47, %49 : vector<8x32xf32>
    %174 = vector.shape_cast %173 : vector<8x32xf32> to vector<1x8x32xf32>
    %cst_47 = arith.constant dense<0.000000e+00> : vector<1xf32>
    %175 = vector.multi_reduction <add>, %174, %cst_47 [1, 2] : vector<1x8x32xf32> to vector<1xf32>
    %176 = vector.shape_cast %175 : vector<1xf32> to vector<1x1x1xf32>
    %177 = vector.extract %176[0, 0, 0] : f32 from vector<1x1x1xf32>
    %cst_48 = arith.constant 2.000000e+00 : f32
    %178 = arith.mulf %cst_48, %177 : f32
    %179 = arith.subf %172, %178 : f32
    %cst_49 = arith.constant 6.250000e-02 : f32
    %180 = arith.mulf %179, %cst_49 : f32
    %181 = arith.addf %149, %180 : f32
    %c0_50 = arith.constant 0 : index
    %c0_51 = arith.constant 0 : index
    %c0_52 = arith.constant 0 : index
    %182 = vector.load %arg1[%c0_50, %c0_51, %c0_52] : memref<9x8x64xf32, #tpu.memory_space<vmem>>, vector<9x8x64xf32>
    %cst_53 = arith.constant dense<0.000000e+00> : vector<9x8xf32>
    %183 = vector.multi_reduction <add>, %182, %cst_53 [2] : vector<9x8x64xf32> to vector<9x8xf32>
    %184 = vector.shape_cast %183 : vector<9x8xf32> to vector<9x8x1xf32>
    %cst_54 = arith.constant dense<0.000000e+00> : vector<9x1xf32>
    %185 = vector.multi_reduction <add>, %184, %cst_54 [1] : vector<9x8x1xf32> to vector<9x1xf32>
    %186 = vector.shape_cast %185 : vector<9x1xf32> to vector<9x1x1xf32>
    %cst_55 = arith.constant 0.001953125 : f32
    %187 = vector.broadcast %cst_55 : f32 to vector<9x1x1xf32>
    %188 = arith.mulf %186, %187 : vector<9x1x1xf32>
    %189 = vector.broadcast %188 : vector<9x1x1xf32> to vector<9x8x64xf32>
    %190 = arith.subf %182, %189 : vector<9x8x64xf32>
    %191 = arith.mulf %190, %190 : vector<9x8x64xf32>
    %cst_56 = arith.constant dense<0.000000e+00> : vector<9x8xf32>
    %192 = vector.multi_reduction <add>, %191, %cst_56 [2] : vector<9x8x64xf32> to vector<9x8xf32>
    %193 = vector.shape_cast %192 : vector<9x8xf32> to vector<9x8x1xf32>
    %cst_57 = arith.constant 1.000000e-24 : f32
    %194 = vector.broadcast %cst_57 : f32 to vector<9x8x1xf32>
    %195 = arith.maximumf %193, %194 : vector<9x8x1xf32>
    %196 = math.rsqrt %195 : vector<9x8x1xf32>
    %197 = vector.broadcast %196 : vector<9x8x1xf32> to vector<9x8x64xf32>
    %198 = arith.mulf %190, %197 : vector<9x8x64xf32>
    %199 = vector.extract_strided_slice %198 {offsets = [6, 0, 0], sizes = [3, 8, 64], strides = [1, 1, 1]} : vector<9x8x64xf32> to vector<3x8x64xf32>
    %200 = vector.extract_strided_slice %198 {offsets = [0, 0, 0], sizes = [3, 8, 64], strides = [1, 1, 1]} : vector<9x8x64xf32> to vector<3x8x64xf32>
    %201 = arith.subf %200, %199 : vector<3x8x64xf32>
    %202 = vector.extract_strided_slice %198 {offsets = [3, 0, 0], sizes = [3, 8, 64], strides = [1, 1, 1]} : vector<9x8x64xf32> to vector<3x8x64xf32>
    %203 = arith.subf %202, %199 : vector<3x8x64xf32>
    %204 = arith.mulf %201, %201 : vector<3x8x64xf32>
    %cst_58 = arith.constant dense<0.000000e+00> : vector<3x8xf32>
    %205 = vector.multi_reduction <add>, %204, %cst_58 [2] : vector<3x8x64xf32> to vector<3x8xf32>
    %206 = vector.shape_cast %205 : vector<3x8xf32> to vector<3x8x1xf32>
    %cst_59 = arith.constant dense<0.000000e+00> : vector<3x1xf32>
    %207 = vector.multi_reduction <add>, %206, %cst_59 [1] : vector<3x8x1xf32> to vector<3x1xf32>
    %208 = vector.shape_cast %207 : vector<3x1xf32> to vector<3x1x1xf32>
    %209 = arith.mulf %203, %203 : vector<3x8x64xf32>
    %cst_60 = arith.constant dense<0.000000e+00> : vector<3x8xf32>
    %210 = vector.multi_reduction <add>, %209, %cst_60 [2] : vector<3x8x64xf32> to vector<3x8xf32>
    %211 = vector.shape_cast %210 : vector<3x8xf32> to vector<3x8x1xf32>
    %cst_61 = arith.constant dense<0.000000e+00> : vector<3x1xf32>
    %212 = vector.multi_reduction <add>, %211, %cst_61 [1] : vector<3x8x1xf32> to vector<3x1xf32>
    %213 = vector.shape_cast %212 : vector<3x1xf32> to vector<3x1x1xf32>
    %214 = math.sqrt %208 : vector<3x1x1xf32>
    %215 = vector.shape_cast %214 : vector<3x1x1xf32> to vector<1x3x1x1xf32>
    %cst_62 = arith.constant dense<0.000000e+00> : vector<1xf32>
    %216 = vector.multi_reduction <add>, %215, %cst_62 [1, 2, 3] : vector<1x3x1x1xf32> to vector<1xf32>
    %217 = vector.shape_cast %216 : vector<1xf32> to vector<1x1x1x1xf32>
    %218 = vector.extract %217[0, 0, 0, 0] : f32 from vector<1x1x1x1xf32>
    %219 = math.sqrt %213 : vector<3x1x1xf32>
    %220 = vector.shape_cast %219 : vector<3x1x1xf32> to vector<1x3x1x1xf32>
    %cst_63 = arith.constant dense<0.000000e+00> : vector<1xf32>
    %221 = vector.multi_reduction <add>, %220, %cst_63 [1, 2, 3] : vector<1x3x1x1xf32> to vector<1xf32>
    %222 = vector.shape_cast %221 : vector<1xf32> to vector<1x1x1x1xf32>
    %223 = vector.extract %222[0, 0, 0, 0] : f32 from vector<1x1x1x1xf32>
    %224 = arith.addf %218, %223 : f32
    %225 = arith.addf %24, %181 : f32
    %cst_64 = arith.constant 0.699999988 : f32
    %226 = arith.mulf %cst_64, %224 : f32
    %227 = arith.addf %225, %226 : f32
    %c0_65 = arith.constant 0 : index
    %228 = memref.load %arg3[%c0_65] : memref<1xf32, #tpu.memory_space<smem>>
    memref.store %227, %arg3[%c0_65] : memref<1xf32, #tpu.memory_space<smem>>
    return
  }
}

</mosaic_0001>

<llo_original>
// kernel: tpu_custom_call.1
$region0: #{tpu_custom_call.1}
  #allocation0 [shape = 'u32[]', space=smem, size = 0x4, offset = 0x4, fixed_abs, tag = 'smem constant byte address 0x4 - core index']
  #allocation1 [shape = 'u32[72,128]{1,0:T(1,128)}', space=vmem, size = 0x9000, scoped, tag = 'internal scratch']
  %s0 = inlined_call_operand.hbm [shape: f32[6,8,32], index: 0, kind: input, shape index: {}]
  %s1 = inlined_call_operand.hbm [shape: f32[9,8,64], index: 1, kind: input, shape index: {}]
  %s2 = inlined_call_operand.hbm [shape: f32[3,8,32], index: 2, kind: input, shape index: {}]
  %s3 = inlined_call_operand.hbm [shape: f32[1], index: 3, kind: output, shape index: {}]
  %s4 = sld [smem:[#allocation0]]
  $region34: #{tpu_custom_call.1} parent=0
    _
  %s6 = ssub.s32 1, %s4
  %s7 = scalar_select 0, %s6, %s4
  $region1: #{tpu_custom_call.1} parent=0
    #allocation2 [shape = 'u8[24576]{0}', space=vmem, size = 0x6000, scoped, tag = 'input window, operand 0, single buffered']
    #allocation3 [shape = 's32[1]{0}', space=sflag, size = 0x4, scoped, tag = 'scoped memory for tpu_custom_call.1']
    #allocation4 [shape = 's32[1]{0}', space=sflag, size = 0x4, scoped, tag = 'scoped memory for tpu_custom_call.1']
    #allocation5 [shape = 'u8[36864]{0}', space=vmem, size = 0x9000, scoped, tag = 'input window, operand 1, single buffered']
    #allocation6 [shape = 's32[1]{0}', space=sflag, size = 0x4, scoped, tag = 'scoped memory for tpu_custom_call.1']
    #allocation7 [shape = 'u8[12288]{0}', space=vmem, size = 0x3000, scoped, tag = 'input window, operand 2, single buffered']
    #allocation8 [shape = 'u8[512]{0}', space=smem, size = 0x200, scoped, tag = 'output window, operand 0, single buffered']
    %8 = vsyncpa [#allocation3], 0
    %9 = vsyncpa [#allocation6], 0
    %10 = vsyncpa [#allocation4], 0
    // Predicated region
    $region2: #{tpu_custom_call.1} parent=1 // pred_check
      _
    $region3: #{tpu_custom_call.1} parent=1 // pred_check_branch
      %12 = sbr.rel (0) target = $region5
    $region4: #{tpu_custom_call.1} parent=1 // pred_region
      %14 = vsyncadd [#allocation3], 0
      %s15 = sshll.u32 %s0, 4
      %s16 = int_to_ptr.hbm [resolvable:$true] %s15
      %s17 = sshll.u32 [#allocation2], 4
      %s18 = int_to_ptr.vmem [resolvable:$true] %s17
      %23 = dma.hbm_to_vmem [thread:$0]  %s16, 768, %s18, [#allocation3], 128, 128, 8
    $region5: #{tpu_custom_call.1} parent=1 // pred_fallthru
      _
    // Predicated region
    $region6: #{tpu_custom_call.1} parent=1 // pred_check
      _
    $region7: #{tpu_custom_call.1} parent=1 // pred_check_branch
      %25 = sbr.rel (0) target = $region9
    $region8: #{tpu_custom_call.1} parent=1 // pred_region
      %27 = vsyncadd [#allocation6], 0
      %s28 = sshll.u32 %s1, 4
      %s29 = int_to_ptr.hbm [resolvable:$true] %s28
      %s30 = sshll.u32 [#allocation5], 4
      %s31 = int_to_ptr.vmem [resolvable:$true] %s30
      %36 = dma.hbm_to_vmem [thread:$0]  %s29, 1152, %s31, [#allocation6], 128, 128, 8
    $region9: #{tpu_custom_call.1} parent=1 // pred_fallthru
      _
    // Predicated region
    $region10: #{tpu_custom_call.1} parent=1 // pred_check
      _
    $region11: #{tpu_custom_call.1} parent=1 // pred_check_branch
      %38 = sbr.rel (0) target = $region13
    $region12: #{tpu_custom_call.1} parent=1 // pred_region
      %40 = vsyncadd [#allocation6], 0
      %s41 = sshll.u32 %s2, 4
      %s42 = int_to_ptr.hbm [resolvable:$true] %s41
      %s43 = sshll.u32 [#allocation7], 4
      %s44 = int_to_ptr.vmem [resolvable:$true] %s43
      %49 = dma.hbm_to_vmem [thread:$0]  %s42, 384, %s44, [#allocation6], 128, 128, 8
    $region13: #{tpu_custom_call.1} parent=1 // pred_fallthru
      _
    // Predicated region
    $region14: #{tpu_custom_call.1} parent=1 // pred_check
      _
    $region15: #{tpu_custom_call.1} parent=1 // pred_check_branch
      %51 = sbr.rel (0) target = $region17
    $region16: #{tpu_custom_call.1} parent=1 // pred_region
      %53 = dma.done [#allocation3], 768
    $region17: #{tpu_custom_call.1} parent=1 // pred_fallthru
      _
    // Predicated region
    $region18: #{tpu_custom_call.1} parent=1 // pred_check
      _
    $region19: #{tpu_custom_call.1} parent=1 // pred_check_branch
      %55 = sbr.rel (0) target = $region21
    $region20: #{tpu_custom_call.1} parent=1 // pred_region
      %57 = dma.done [#allocation6], 1152
    $region21: #{tpu_custom_call.1} parent=1 // pred_fallthru
      _
    // Predicated region
    $region22: #{tpu_custom_call.1} parent=1 // pred_check
      _
    $region23: #{tpu_custom_call.1} parent=1 // pred_check_branch
      %59 = sbr.rel (0) target = $region25
    $region24: #{tpu_custom_call.1} parent=1 // pred_region
      %61 = dma.done [#allocation6], 384
    $region25: #{tpu_custom_call.1} parent=1 // pred_fallthru
      _
    %v62 = vld [vmem:[#allocation2] sm:$0xff]
    %v63 = vld [vmem:[#allocation2 + $0x8] sm:$0xff]
    %v64 = vld [vmem:[#allocation2 + $0x10] sm:$0xff]
    %v65 = vld [vmem:[#allocation2 + $0x18] sm:$0xff]
    %v66 = vld [vmem:[#allocation2 + $0x20] sm:$0xff]
    %v67 = vld [vmem:[#allocation2 + $0x28] sm:$0xff]
    %vm68 = vcmask 261120
    %v69 = vsel %vm68, %v62, 0.0
    %70 = vadd.xlane.f32.xlu0 %v69
    %v71 = vpop.xlane.xlu0 %70
    %v72 = vsel %vm68, %v63, 0.0
    %73 = vadd.xlane.f32.xlu0 %v72
    %v74 = vpop.xlane.xlu0 %73
    %v75 = vsel %vm68, %v64, 0.0
    %76 = vadd.xlane.f32.xlu0 %v75
    %v77 = vpop.xlane.xlu0 %76
    %v78 = vsel %vm68, %v65, 0.0
    %79 = vadd.xlane.f32.xlu0 %v78
    %v80 = vpop.xlane.xlu0 %79
    %v81 = vsel %vm68, %v66, 0.0
    %82 = vadd.xlane.f32.xlu0 %v81
    %v83 = vpop.xlane.xlu0 %82
    %v84 = vsel %vm68, %v67, 0.0
    %85 = vadd.xlane.f32.xlu0 %v84
    %v86 = vpop.xlane.xlu0 %85
    %v87 = vrot.slane %v71, 4
    %v88 = vadd.f32 %v71, %v87
    %v89 = vrot.slane %v88, 2
    %v90 = vadd.f32 %v88, %v89
    %v91 = vrot.slane %v90, 1
    %v92 = vadd.f32 %v90, %v91
    %v93 = vrot.slane %v74, 4
    %v94 = vadd.f32 %v74, %v93
    %v95 = vrot.slane %v94, 2
    %v96 = vadd.f32 %v94, %v95
    %v97 = vrot.slane %v96, 1
    %v98 = vadd.f32 %v96, %v97
    %v99 = vrot.slane %v77, 4
    %v100 = vadd.f32 %v77, %v99
    %v101 = vrot.slane %v100, 2
    %v102 = vadd.f32 %v100, %v101
    %v103 = vrot.slane %v102, 1
    %v104 = vadd.f32 %v102, %v103
    %v105 = vrot.slane %v80, 4
    %v106 = vadd.f32 %v80, %v105
    %v107 = vrot.slane %v106, 2
    %v108 = vadd.f32 %v106, %v107
    %v109 = vrot.slane %v108, 1
    %v110 = vadd.f32 %v108, %v109
    %v111 = vrot.slane %v83, 4
    %v112 = vadd.f32 %v83, %v111
    %v113 = vrot.slane %v112, 2
    %v114 = vadd.f32 %v112, %v113
    %v115 = vrot.slane %v114, 1
    %v116 = vadd.f32 %v114, %v115
    %v117 = vrot.slane %v86, 4
    %v118 = vadd.f32 %v86, %v117
    %v119 = vrot.slane %v118, 2
    %v120 = vadd.f32 %v118, %v119
    %v121 = vrot.slane %v120, 1
    %v122 = vadd.f32 %v120, %v121
    %v123 = vmul.f32 %v92, 0.00390625
    %v124 = vmul.f32 %v98, 0.00390625
    %v125 = vmul.f32 %v104, 0.00390625
    %v126 = vmul.f32 %v110, 0.00390625
    %v127 = vmul.f32 %v116, 0.00390625
    %v128 = vmul.f32 %v122, 0.00390625
    %v129 = vsub.f32 %v62, %v123
    %v130 = vsub.f32 %v63, %v124
    %v131 = vsub.f32 %v64, %v125
    %v132 = vsub.f32 %v65, %v126
    %v133 = vsub.f32 %v66, %v127
    %v134 = vsub.f32 %v67, %v128
    %v135 = vmul.f32 %v129, %v129
    %v136 = vmul.f32 %v130, %v130
    %v137 = vmul.f32 %v131, %v131
    %v138 = vmul.f32 %v132, %v132
    %v139 = vmul.f32 %v133, %v133
    %v140 = vmul.f32 %v134, %v134
    %v141 = vsel %vm68, %v135, 0.0
    %142 = vadd.xlane.f32.xlu0 %v141
    %v143 = vpop.xlane.xlu0 %142
    %v144 = vsel %vm68, %v136, 0.0
    %145 = vadd.xlane.f32.xlu0 %v144
    %v146 = vpop.xlane.xlu0 %145
    %v147 = vsel %vm68, %v137, 0.0
    %148 = vadd.xlane.f32.xlu0 %v147
    %v149 = vpop.xlane.xlu0 %148
    %v150 = vsel %vm68, %v138, 0.0
    %151 = vadd.xlane.f32.xlu0 %v150
    %v152 = vpop.xlane.xlu0 %151
    %v153 = vsel %vm68, %v139, 0.0
    %154 = vadd.xlane.f32.xlu0 %v153
    %v155 = vpop.xlane.xlu0 %154
    %v156 = vsel %vm68, %v140, 0.0
    %157 = vadd.xlane.f32.xlu0 %v156
    %v158 = vpop.xlane.xlu0 %157
    %v159 = vmax.f32 %v143, 1e-24
    %v160 = vmax.f32 %v146, 1e-24
    %v161 = vmax.f32 %v149, 1e-24
    %v162 = vmax.f32 %v152, 1e-24
    %v163 = vmax.f32 %v155, 1e-24
    %v164 = vmax.f32 %v158, 1e-24
    %v165 = vrsqrt.pop %v159
    %v166 = vmul.f32 %v165, %v159
    %v167 = vmul.f32 %v166, %v165
    %v168 = vmul.f32 0.5, %v167
    %v169 = vsub.f32 1.5, %v168
    %v170 = vmul.f32 %v165, %v169
    %vm171 = vweird.f32 %v159
    %vm172 = vweird.f32 %v165
    %vm173 = vmor %vm171, %vm172
    %v174 = vsel %vm173, %v165, %v170
    %v175 = vrsqrt.pop %v160
    %v176 = vmul.f32 %v175, %v160
    %v177 = vmul.f32 %v176, %v175
    %v178 = vmul.f32 0.5, %v177
    %v179 = vsub.f32 1.5, %v178
    %v180 = vmul.f32 %v175, %v179
    %vm181 = vweird.f32 %v160
    %vm182 = vweird.f32 %v175
    %vm183 = vmor %vm181, %vm182
    %v184 = vsel %vm183, %v175, %v180
    %v185 = vrsqrt.pop %v161
    %v186 = vmul.f32 %v185, %v161
    %v187 = vmul.f32 %v186, %v185
    %v188 = vmul.f32 0.5, %v187
    %v189 = vsub.f32 1.5, %v188
    %v190 = vmul.f32 %v185, %v189
    %vm191 = vweird.f32 %v161
    %vm192 = vweird.f32 %v185
    %vm193 = vmor %vm191, %vm192
    %v194 = vsel %vm193, %v185, %v190
    %v195 = vrsqrt.pop %v162
    %v196 = vmul.f32 %v195, %v162
    %v197 = vmul.f32 %v196, %v195
    %v198 = vmul.f32 0.5, %v197
    %v199 = vsub.f32 1.5, %v198
    %v200 = vmul.f32 %v195, %v199
    %vm201 = vweird.f32 %v162
    %vm202 = vweird.f32 %v195
    %vm203 = vmor %vm201, %vm202
    %v204 = vsel %vm203, %v195, %v200
    %v205 = vrsqrt.pop %v163
    %v206 = vmul.f32 %v205, %v163
    %v207 = vmul.f32 %v206, %v205
    %v208 = vmul.f32 0.5, %v207
    %v209 = vsub.f32 1.5, %v208
    %v210 = vmul.f32 %v205, %v209
    %vm211 = vweird.f32 %v163
    %vm212 = vweird.f32 %v205
    %vm213 = vmor %vm211, %vm212
    %v214 = vsel %vm213, %v205, %v210
    %v215 = vrsqrt.pop %v164
    %v216 = vmul.f32 %v215, %v164
    %v217 = vmul.f32 %v216, %v215
    %v218 = vmul.f32 0.5, %v217
    %v219 = vsub.f32 1.5, %v218
    %v220 = vmul.f32 %v215, %v219
    %vm221 = vweird.f32 %v164
    %vm222 = vweird.f32 %v215
    %vm223 = vmor %vm221, %vm222
    %v224 = vsel %vm223, %v215, %v220
    %v225 = vmul.f32 %v129, %v174
    %v226 = vmul.f32 %v130, %v184
    %v227 = vmul.f32 %v131, %v194
    %v228 = vmul.f32 %v132, %v204
    %v229 = vmul.f32 %v133, %v214
    %v230 = vmul.f32 %v134, %v224
    %v231 = vmul.f32 %v225, %v228
    %v232 = vmul.f32 %v226, %v229
    %v233 = vmul.f32 %v227, %v230
    %v234 = vsel %vm68, %v231, 0.0
    %v235 = vsel %vm68, %v232, 0.0
    %v236 = vadd.f32 %v234, %v235
    %v237 = vsel %vm68, %v233, 0.0
    %v238 = vadd.f32 %v236, %v237
    %239 = vadd.xlane.f32.xlu0 %v238
    %v240 = vpop.xlane.xlu0 %239
    %v241 = vrot.slane %v240, 4
    %v242 = vadd.f32 %v240, %v241
    %v243 = vrot.slane %v242, 2
    %v244 = vadd.f32 %v242, %v243
    %v245 = vrot.slane %v244, 1
    %v246 = vadd.f32 %v244, %v245
    %s247 = vtos %v246
    %s248 = smul.f32 %s247, 0.00390625
    %v249 = vld [vmem:[#allocation7] sm:$0xff]
    %v250 = vld [vmem:[#allocation7 + $0x8] sm:$0xff]
    %v251 = vld [vmem:[#allocation7 + $0x10] sm:$0xff]
    %v252 = vsel %vm68, %v249, 0.0
    %253 = vadd.xlane.f32.xlu0 %v252
    %v254 = vpop.xlane.xlu0 %253
    %v255 = vsel %vm68, %v250, 0.0
    %256 = vadd.xlane.f32.xlu0 %v255
    %v257 = vpop.xlane.xlu0 %256
    %v258 = vsel %vm68, %v251, 0.0
    %259 = vadd.xlane.f32.xlu0 %v258
    %v260 = vpop.xlane.xlu0 %259
    %v261 = vrot.slane %v254, 4
    %v262 = vadd.f32 %v254, %v261
    %v263 = vrot.slane %v262, 2
    %v264 = vadd.f32 %v262, %v263
    %v265 = vrot.slane %v264, 1
    %v266 = vadd.f32 %v264, %v265
    %v267 = vrot.slane %v257, 4
    %v268 = vadd.f32 %v257, %v267
    %v269 = vrot.slane %v268, 2
    %v270 = vadd.f32 %v268, %v269
    %v271 = vrot.slane %v270, 1
    %v272 = vadd.f32 %v270, %v271
    %v273 = vrot.slane %v260, 4
    %v274 = vadd.f32 %v260, %v273
    %v275 = vrot.slane %v274, 2
    %v276 = vadd.f32 %v274, %v275
    %v277 = vrot.slane %v276, 1
    %v278 = vadd.f32 %v276, %v277
    %v279 = vmul.f32 %v266, 0.00390625
    %v280 = vmul.f32 %v272, 0.00390625
    %v281 = vmul.f32 %v278, 0.00390625
    %v282 = vsub.f32 %v249, %v279
    %v283 = vsub.f32 %v250, %v280
    %v284 = vsub.f32 %v251, %v281
    %v285 = vmul.f32 %v282, %v282
    %v286 = vmul.f32 %v283, %v283
    %v287 = vmul.f32 %v284, %v284
    %v288 = vsel %vm68, %v285, 0.0
    %289 = vadd.xlane.f32.xlu0 %v288
    %v290 = vpop.xlane.xlu0 %289
    %v291 = vsel %vm68, %v286, 0.0
    %292 = vadd.xlane.f32.xlu0 %v291
    %v293 = vpop.xlane.xlu0 %292
    %v294 = vsel %vm68, %v287, 0.0
    %295 = vadd.xlane.f32.xlu0 %v294
    %v296 = vpop.xlane.xlu0 %295
    %v297 = vmax.f32 %v290, 1e-24
    %v298 = vmax.f32 %v293, 1e-24
    %v299 = vmax.f32 %v296, 1e-24
    %v300 = vrsqrt.pop %v297
    %v301 = vmul.f32 %v300, %v297
    %v302 = vmul.f32 %v301, %v300
    %v303 = vmul.f32 0.5, %v302
    %v304 = vsub.f32 1.5, %v303
    %v305 = vmul.f32 %v300, %v304
    %vm306 = vweird.f32 %v297
    %vm307 = vweird.f32 %v300
    %vm308 = vmor %vm306, %vm307
    %v309 = vsel %vm308, %v300, %v305
    %v310 = vrsqrt.pop %v298
    %v311 = vmul.f32 %v310, %v298
    %v312 = vmul.f32 %v311, %v310
    %v313 = vmul.f32 0.5, %v312
    %v314 = vsub.f32 1.5, %v313
    %v315 = vmul.f32 %v310, %v314
    %vm316 = vweird.f32 %v298
    %vm317 = vweird.f32 %v310
    %vm318 = vmor %vm316, %vm317
    %v319 = vsel %vm318, %v310, %v315
    %v320 = vrsqrt.pop %v299
    %v321 = vmul.f32 %v320, %v299
    %v322 = vmul.f32 %v321, %v320
    %v323 = vmul.f32 0.5, %v322
    %v324 = vsub.f32 1.5, %v323
    %v325 = vmul.f32 %v320, %v324
    %vm326 = vweird.f32 %v299
    %vm327 = vweird.f32 %v320
    %vm328 = vmor %vm326, %vm327
    %v329 = vsel %vm328, %v320, %v325
    %v330 = vmul.f32 %v309, 1.4142135
    %v331 = vmul.f32 %v319, 1.4142135
    %v332 = vmul.f32 %v329, 1.4142135
    %v333 = vmul.f32 %v282, %v330
    %v334 = vmul.f32 %v283, %v331
    %v335 = vmul.f32 %v284, %v332
    %v337 = vsel %vm68, %v333, 0
    %v340 = vsel %vm68, %v334, 0
    %v343 = vsel %vm68, %v335, 0
    %345 = vmatpush.xpose.msra.mxu0 0.0
    %346 = vmatpush.xpose.msra.mxu0 0.0
    %347 = vmatpush.xpose.msra.mxu0 0.0
    %348 = vmatpush.xpose.msra.mxu0 0.0
    %349 = vmatpush.xpose.msra.mxu0 0.0
    %350 = vmatpush.xpose.msra.mxu0 0.0
    %351 = vmatpush.xpose.msra.mxu0 0.0
    %352 = vmatpush.xpose.msra.mxu0 0.0
    %353 = vmatpush.xpose.msra.mxu0 0.0
    %354 = vmatpush.xpose.msra.mxu0 0.0
    %355 = vmatpush.xpose.msra.mxu0 0.0
    %356 = vmatpush.xpose.msra.mxu0 0.0
    %357 = vmatpush.xpose.msra.mxu0 0.0
    %358 = vmatpush.xpose.msra.mxu0 %v343
    %359 = vmatpush.xpose.msra.mxu0 %v340
    %360 = vmatpush.xpose.msra.mxu0 %v337
    %361 = vmatmul.f32.gmra.mxu0 %v337
    %v362 = vpop.f32.mrf.mxu0
    %v363 = vadd.f32 0.0, %v362
    %364 = vmatmul.f32.gmra.mxu0 %v340
    %v365 = vpop.f32.mrf.mxu0
    %v366 = vadd.f32 0.0, %v365
    %367 = vmatmul.f32.gmra.mxu0 %v343
    %v368 = vpop.f32.mrf.mxu0
    %v369 = vadd.f32 0.0, %v368
    %370 = vdwg.mxu0
    %v371 = vlaneseq
    %v372 = vshrl.u32 %v371, 7
    %v373 = vadd.s32 %v372, 8
    %v374 = vadd.s32 %v372, 16
    %v375 = vlaneseq
    %v376 = vand.u32 %v375, 127
    %vm377 = vcmp.ne.s32.totalorder %v372, %v376
    %vm378 = vcmp.ne.s32.totalorder %v373, %v376
    %vm379 = vcmp.ne.s32.totalorder %v374, %v376
    %vm380 = vcmp.ge.s32.totalorder %v372, 0
    %vm381 = vcmp.ge.s32.totalorder %v373, 0
    %vm382 = vcmp.ge.s32.totalorder %v374, 0
    %vm383 = vcmp.lt.s32.totalorder %v372, 8
    %vm384 = vcmp.lt.s32.totalorder %v373, 8
    %vm385 = vcmp.lt.s32.totalorder %v374, 8
    %vm386 = vmand %vm380, %vm383
    %vm387 = vmand %vm381, %vm384
    %vm388 = vmand %vm382, %vm385
    %vm389 = vcmp.ge.s32.totalorder %v372, 8
    %vm390 = vcmp.ge.s32.totalorder %v373, 8
    %vm391 = vcmp.ge.s32.totalorder %v374, 8
    %vm392 = vcmp.lt.s32.totalorder %v372, 16
    %vm393 = vcmp.lt.s32.totalorder %v373, 16
    %vm394 = vcmp.lt.s32.totalorder %v374, 16
    %vm395 = vmand %vm389, %vm392
    %vm396 = vmand %vm390, %vm393
    %vm397 = vmand %vm391, %vm394
    %vm398 = vcmp.ge.s32.totalorder %v372, 16
    %vm399 = vcmp.ge.s32.totalorder %v373, 16
    %vm400 = vcmp.ge.s32.totalorder %v374, 16
    %vm401 = vcmp.lt.s32.totalorder %v372, 24
    %vm402 = vcmp.lt.s32.totalorder %v373, 24
    %vm403 = vcmp.lt.s32.totalorder %v374, 24
    %vm404 = vmand %vm398, %vm401
    %vm405 = vmand %vm399, %vm402
    %vm406 = vmand %vm400, %vm403
    %vm407 = vcmp.ge.s32.totalorder %v376, 0
    %vm408 = vcmp.lt.s32.totalorder %v376, 8
    %vm409 = vmand %vm407, %vm408
    %vm410 = vcmp.ge.s32.totalorder %v376, 8
    %vm411 = vcmp.lt.s32.totalorder %v376, 16
    %vm412 = vmand %vm410, %vm411
    %vm413 = vcmp.ge.s32.totalorder %v376, 16
    %vm414 = vcmp.lt.s32.totalorder %v376, 24
    %vm415 = vmand %vm413, %vm414
    %vm416 = vmor %vm386, %vm395
    %vm417 = vmor %vm387, %vm396
    %vm418 = vmor %vm388, %vm397
    %vm419 = vmor %vm409, %vm412
    %v420 = vsel %vm416, 1, 0
    %v421 = vsel %vm417, 1, 0
    %v422 = vsel %vm418, 1, 0
    %vm423 = vcmp.eq.s32.totalorder %v420, 1
    %vm424 = vcmp.eq.s32.totalorder %v421, 1
    %vm425 = vcmp.eq.s32.totalorder %v422, 1
    %v426 = vsel %vm419, 1, 0
    %vm427 = vcmp.eq.s32.totalorder %v426, 1
    %vm428 = vmand %vm423, %vm427
    %vm429 = vmand %vm424, %vm427
    %vm430 = vmand %vm425, %vm427
    %vm431 = vmand %vm428, %vm377
    %vm432 = vmand %vm429, %vm378
    %vm433 = vmand %vm430, %vm379
    %v434 = vsel %vm431, %v363, -1e+30
    %v435 = vsel %vm432, %v366, -1e+30
    %v436 = vsel %vm433, %v369, -1e+30
    %vm437 = vcmask 195584
    %v438 = vsel %vm437, %v434, -inf
    %439 = vmax.xlane.f32.xlu0 %v438
    %v440 = vpop.xlane.xlu0 %439
    %v441 = vsel %vm437, %v435, -inf
    %442 = vmax.xlane.f32.xlu0 %v441
    %v443 = vpop.xlane.xlu0 %442
    %v444 = vsel %vm437, %v436, -inf
    %445 = vmax.xlane.f32.xlu0 %v444
    %v446 = vpop.xlane.xlu0 %445
    %v447 = vsub.f32 %v434, %v440
    %v448 = vsub.f32 %v435, %v443
    %v449 = vsub.f32 %v436, %v446
    %v450 = vmul.f32 %v447, 1.442695
    %v451 = vpow.pop %v450
    %v452 = vmul.f32 %v448, 1.442695
    %v453 = vpow.pop %v452
    %v454 = vmul.f32 %v449, 1.442695
    %v455 = vpow.pop %v454
    %v456 = vsel %vm437, %v451, 0.0
    %457 = vadd.xlane.f32.xlu0 %v456
    %v458 = vpop.xlane.xlu0 %457
    %v459 = vsel %vm437, %v453, 0.0
    %460 = vadd.xlane.f32.xlu0 %v459
    %v461 = vpop.xlane.xlu0 %460
    %v462 = vsel %vm437, %v455, 0.0
    %463 = vadd.xlane.f32.xlu0 %v462
    %v464 = vpop.xlane.xlu0 %463
    %v465 = vlog2.pop %v458
    %v466 = vmul.f32 %v465, 0.6931472
    %v467 = vlog2.pop %v461
    %v468 = vmul.f32 %v467, 0.6931472
    %v469 = vlog2.pop %v464
    %v470 = vmul.f32 %v469, 0.6931472
    %v471 = vadd.f32 %v466, %v440
    %v472 = vadd.f32 %v468, %v443
    %v473 = vadd.f32 %v470, %v446
    %v474 = vsel %vm416, %v471, 0.0
    %v475 = vsel %vm417, %v472, 0.0
    %v476 = vsel %vm418, %v473, 0.0
    %vm477 = vcmask 7168
    %v478 = vsel %vm477, %v474, 0.0
    %v479 = vsel %vm477, %v475, 0.0
    %v480 = vadd.f32 %v478, %v479
    %v481 = vsel %vm477, %v476, 0.0
    %v482 = vadd.f32 %v480, %v481
    %483 = vadd.xlane.f32.xlu0 %v482
    %v484 = vpop.xlane.xlu0 %483
    %v485 = vrot.slane %v484, 4
    %v486 = vadd.f32 %v484, %v485
    %v487 = vrot.slane %v486, 2
    %v488 = vadd.f32 %v486, %v487
    %v489 = vrot.slane %v488, 1
    %v490 = vadd.f32 %v488, %v489
    %s491 = vtos %v490
    %v492 = vmul.f32 %v333, %v334
    %v493 = vsel %vm68, %v492, 0.0
    %494 = vadd.xlane.f32.xlu0 %v493
    %v495 = vpop.xlane.xlu0 %494
    %v496 = vrot.slane %v495, 4
    %v497 = vadd.f32 %v495, %v496
    %v498 = vrot.slane %v497, 2
    %v499 = vadd.f32 %v497, %v498
    %v500 = vrot.slane %v499, 1
    %v501 = vadd.f32 %v499, %v500
    %s502 = vtos %v501
    %s503 = smul.f32 %s502, 2.0
    %s504 = ssub.f32 %s491, %s503
    %s505 = smul.f32 %s504, 0.0625
    %vm506 = vmor %vm386, %vm404
    %vm507 = vmor %vm387, %vm405
    %vm508 = vmor %vm388, %vm406
    %vm509 = vmor %vm409, %vm415
    %v510 = vsel %vm506, 1, 0
    %v511 = vsel %vm507, 1, 0
    %v512 = vsel %vm508, 1, 0
    %vm513 = vcmp.eq.s32.totalorder %v510, 1
    %vm514 = vcmp.eq.s32.totalorder %v511, 1
    %vm515 = vcmp.eq.s32.totalorder %v512, 1
    %v516 = vsel %vm509, 1, 0
    %vm517 = vcmp.eq.s32.totalorder %v516, 1
    %vm518 = vmand %vm513, %vm517
    %vm519 = vmand %vm514, %vm517
    %vm520 = vmand %vm515, %vm517
    %vm521 = vmand %vm518, %vm377
    %vm522 = vmand %vm519, %vm378
    %vm523 = vmand %vm520, %vm379
    %v524 = vsel %vm521, %v363, -1e+30
    %v525 = vsel %vm522, %v366, -1e+30
    %v526 = vsel %vm523, %v369, -1e+30
    %v527 = vsel %vm437, %v524, -inf
    %528 = vmax.xlane.f32.xlu0 %v527
    %v529 = vpop.xlane.xlu0 %528
    %v530 = vsel %vm437, %v525, -inf
    %531 = vmax.xlane.f32.xlu0 %v530
    %v532 = vpop.xlane.xlu0 %531
    %v533 = vsel %vm437, %v526, -inf
    %534 = vmax.xlane.f32.xlu0 %v533
    %v535 = vpop.xlane.xlu0 %534
    %v536 = vsub.f32 %v524, %v529
    %v537 = vsub.f32 %v525, %v532
    %v538 = vsub.f32 %v526, %v535
    %v539 = vmul.f32 %v536, 1.442695
    %v540 = vpow.pop %v539
    %v541 = vmul.f32 %v537, 1.442695
    %v542 = vpow.pop %v541
    %v543 = vmul.f32 %v538, 1.442695
    %v544 = vpow.pop %v543
    %v545 = vsel %vm437, %v540, 0.0
    %546 = vadd.xlane.f32.xlu0 %v545
    %v547 = vpop.xlane.xlu0 %546
    %v548 = vsel %vm437, %v542, 0.0
    %549 = vadd.xlane.f32.xlu0 %v548
    %v550 = vpop.xlane.xlu0 %549
    %v551 = vsel %vm437, %v544, 0.0
    %552 = vadd.xlane.f32.xlu0 %v551
    %v553 = vpop.xlane.xlu0 %552
    %v554 = vlog2.pop %v547
    %v555 = vmul.f32 %v554, 0.6931472
    %v556 = vlog2.pop %v550
    %v557 = vmul.f32 %v556, 0.6931472
    %v558 = vlog2.pop %v553
    %v559 = vmul.f32 %v558, 0.6931472
    %v560 = vadd.f32 %v555, %v529
    %v561 = vadd.f32 %v557, %v532
    %v562 = vadd.f32 %v559, %v535
    %v563 = vsel %vm506, %v560, 0.0
    %v564 = vsel %vm507, %v561, 0.0
    %v565 = vsel %vm508, %v562, 0.0
    %v566 = vsel %vm477, %v563, 0.0
    %v567 = vsel %vm477, %v564, 0.0
    %v568 = vadd.f32 %v566, %v567
    %v569 = vsel %vm477, %v565, 0.0
    %v570 = vadd.f32 %v568, %v569
    %571 = vadd.xlane.f32.xlu0 %v570
    %v572 = vpop.xlane.xlu0 %571
    %v573 = vrot.slane %v572, 4
    %v574 = vadd.f32 %v572, %v573
    %v575 = vrot.slane %v574, 2
    %v576 = vadd.f32 %v574, %v575
    %v577 = vrot.slane %v576, 1
    %v578 = vadd.f32 %v576, %v577
    %s579 = vtos %v578
    %v580 = vmul.f32 %v333, %v335
    %v581 = vsel %vm68, %v580, 0.0
    %582 = vadd.xlane.f32.xlu0 %v581
    %v583 = vpop.xlane.xlu0 %582
    %v584 = vrot.slane %v583, 4
    %v585 = vadd.f32 %v583, %v584
    %v586 = vrot.slane %v585, 2
    %v587 = vadd.f32 %v585, %v586
    %v588 = vrot.slane %v587, 1
    %v589 = vadd.f32 %v587, %v588
    %s590 = vtos %v589
    %s591 = smul.f32 %s590, 2.0
    %s592 = ssub.f32 %s579, %s591
    %s593 = smul.f32 %s592, 0.0625
    %s594 = sadd.f32 %s505, %s593
    %vm595 = vmor %vm395, %vm404
    %vm596 = vmor %vm396, %vm405
    %vm597 = vmor %vm397, %vm406
    %vm598 = vmor %vm412, %vm415
    %v599 = vsel %vm595, 1, 0
    %v600 = vsel %vm596, 1, 0
    %v601 = vsel %vm597, 1, 0
    %vm602 = vcmp.eq.s32.totalorder %v599, 1
    %vm603 = vcmp.eq.s32.totalorder %v600, 1
    %vm604 = vcmp.eq.s32.totalorder %v601, 1
    %v605 = vsel %vm598, 1, 0
    %vm606 = vcmp.eq.s32.totalorder %v605, 1
    %vm607 = vmand %vm602, %vm606
    %vm608 = vmand %vm603, %vm606
    %vm609 = vmand %vm604, %vm606
    %vm610 = vmand %vm607, %vm377
    %vm611 = vmand %vm608, %vm378
    %vm612 = vmand %vm609, %vm379
    %v613 = vsel %vm610, %v363, -1e+30
    %v614 = vsel %vm611, %v366, -1e+30
    %v615 = vsel %vm612, %v369, -1e+30
    %v616 = vsel %vm437, %v613, -inf
    %617 = vmax.xlane.f32.xlu0 %v616
    %v618 = vpop.xlane.xlu0 %617
    %v619 = vsel %vm437, %v614, -inf
    %620 = vmax.xlane.f32.xlu0 %v619
    %v621 = vpop.xlane.xlu0 %620
    %v622 = vsel %vm437, %v615, -inf
    %623 = vmax.xlane.f32.xlu0 %v622
    %v624 = vpop.xlane.xlu0 %623
    %v625 = vsub.f32 %v613, %v618
    %v626 = vsub.f32 %v614, %v621
    %v627 = vsub.f32 %v615, %v624
    %v628 = vmul.f32 %v625, 1.442695
    %v629 = vpow.pop %v628
    %v630 = vmul.f32 %v626, 1.442695
    %v631 = vpow.pop %v630
    %v632 = vmul.f32 %v627, 1.442695
    %v633 = vpow.pop %v632
    %v634 = vsel %vm437, %v629, 0.0
    %635 = vadd.xlane.f32.xlu0 %v634
    %v636 = vpop.xlane.xlu0 %635
    %v637 = vsel %vm437, %v631, 0.0
    %638 = vadd.xlane.f32.xlu0 %v637
    %v639 = vpop.xlane.xlu0 %638
    %v640 = vsel %vm437, %v633, 0.0
    %641 = vadd.xlane.f32.xlu0 %v640
    %v642 = vpop.xlane.xlu0 %641
    %v643 = vlog2.pop %v636
    %v644 = vmul.f32 %v643, 0.6931472
    %v645 = vlog2.pop %v639
    %v646 = vmul.f32 %v645, 0.6931472
    %v647 = vlog2.pop %v642
    %v648 = vmul.f32 %v647, 0.6931472
    %v649 = vadd.f32 %v644, %v618
    %v650 = vadd.f32 %v646, %v621
    %v651 = vadd.f32 %v648, %v624
    %v652 = vsel %vm595, %v649, 0.0
    %v653 = vsel %vm596, %v650, 0.0
    %v654 = vsel %vm597, %v651, 0.0
    %v655 = vsel %vm477, %v652, 0.0
    %v656 = vsel %vm477, %v653, 0.0
    %v657 = vadd.f32 %v655, %v656
    %v658 = vsel %vm477, %v654, 0.0
    %v659 = vadd.f32 %v657, %v658
    %660 = vadd.xlane.f32.xlu0 %v659
    %v661 = vpop.xlane.xlu0 %660
    %v662 = vrot.slane %v661, 4
    %v663 = vadd.f32 %v661, %v662
    %v664 = vrot.slane %v663, 2
    %v665 = vadd.f32 %v663, %v664
    %v666 = vrot.slane %v665, 1
    %v667 = vadd.f32 %v665, %v666
    %s668 = vtos %v667
    %v669 = vmul.f32 %v334, %v335
    %v670 = vsel %vm68, %v669, 0.0
    %671 = vadd.xlane.f32.xlu0 %v670
    %v672 = vpop.xlane.xlu0 %671
    %v673 = vrot.slane %v672, 4
    %v674 = vadd.f32 %v672, %v673
    %v675 = vrot.slane %v674, 2
    %v676 = vadd.f32 %v674, %v675
    %v677 = vrot.slane %v676, 1
    %v678 = vadd.f32 %v676, %v677
    %s679 = vtos %v678
    %s680 = smul.f32 %s679, 2.0
    %s681 = ssub.f32 %s668, %s680
    %s682 = smul.f32 %s681, 0.0625
    %s683 = sadd.f32 %s594, %s682
    %v684 = vld [vmem:[#allocation5] sm:$0xff]
    %v685 = vld [vmem:[#allocation5 + $0x8] sm:$0xff]
    %v686 = vld [vmem:[#allocation5 + $0x10] sm:$0xff]
    %v687 = vld [vmem:[#allocation5 + $0x18] sm:$0xff]
    %v688 = vld [vmem:[#allocation5 + $0x20] sm:$0xff]
    %v689 = vld [vmem:[#allocation5 + $0x28] sm:$0xff]
    %v690 = vld [vmem:[#allocation5 + $0x30] sm:$0xff]
    %v691 = vld [vmem:[#allocation5 + $0x38] sm:$0xff]
    %v692 = vld [vmem:[#allocation5 + $0x40] sm:$0xff]
    %vm693 = vcmask 523264
    %v694 = vsel %vm693, %v684, 0.0
    %695 = vadd.xlane.f32.xlu0 %v694
    %v696 = vpop.xlane.xlu0 %695
    %v697 = vsel %vm693, %v685, 0.0
    %698 = vadd.xlane.f32.xlu0 %v697
    %v699 = vpop.xlane.xlu0 %698
    %v700 = vsel %vm693, %v686, 0.0
    %701 = vadd.xlane.f32.xlu0 %v700
    %v702 = vpop.xlane.xlu0 %701
    %v703 = vsel %vm693, %v687, 0.0
    %704 = vadd.xlane.f32.xlu0 %v703
    %v705 = vpop.xlane.xlu0 %704
    %v706 = vsel %vm693, %v688, 0.0
    %707 = vadd.xlane.f32.xlu0 %v706
    %v708 = vpop.xlane.xlu0 %707
    %v709 = vsel %vm693, %v689, 0.0
    %710 = vadd.xlane.f32.xlu0 %v709
    %v711 = vpop.xlane.xlu0 %710
    %v712 = vsel %vm693, %v690, 0.0
    %713 = vadd.xlane.f32.xlu0 %v712
    %v714 = vpop.xlane.xlu0 %713
    %v715 = vsel %vm693, %v691, 0.0
    %716 = vadd.xlane.f32.xlu0 %v715
    %v717 = vpop.xlane.xlu0 %716
    %v718 = vsel %vm693, %v692, 0.0
    %719 = vadd.xlane.f32.xlu0 %v718
    %v720 = vpop.xlane.xlu0 %719
    %v721 = vrot.slane %v696, 4
    %v722 = vadd.f32 %v696, %v721
    %v723 = vrot.slane %v722, 2
    %v724 = vadd.f32 %v722, %v723
    %v725 = vrot.slane %v724, 1
    %v726 = vadd.f32 %v724, %v725
    %v727 = vrot.slane %v699, 4
    %v728 = vadd.f32 %v699, %v727
    %v729 = vrot.slane %v728, 2
    %v730 = vadd.f32 %v728, %v729
    %v731 = vrot.slane %v730, 1
    %v732 = vadd.f32 %v730, %v731
    %v733 = vrot.slane %v702, 4
    %v734 = vadd.f32 %v702, %v733
    %v735 = vrot.slane %v734, 2
    %v736 = vadd.f32 %v734, %v735
    %v737 = vrot.slane %v736, 1
    %v738 = vadd.f32 %v736, %v737
    %v739 = vrot.slane %v705, 4
    %v740 = vadd.f32 %v705, %v739
    %v741 = vrot.slane %v740, 2
    %v742 = vadd.f32 %v740, %v741
    %v743 = vrot.slane %v742, 1
    %v744 = vadd.f32 %v742, %v743
    %v745 = vrot.slane %v708, 4
    %v746 = vadd.f32 %v708, %v745
    %v747 = vrot.slane %v746, 2
    %v748 = vadd.f32 %v746, %v747
    %v749 = vrot.slane %v748, 1
    %v750 = vadd.f32 %v748, %v749
    %v751 = vrot.slane %v711, 4
    %v752 = vadd.f32 %v711, %v751
    %v753 = vrot.slane %v752, 2
    %v754 = vadd.f32 %v752, %v753
    %v755 = vrot.slane %v754, 1
    %v756 = vadd.f32 %v754, %v755
    %v757 = vrot.slane %v714, 4
    %v758 = vadd.f32 %v714, %v757
    %v759 = vrot.slane %v758, 2
    %v760 = vadd.f32 %v758, %v759
    %v761 = vrot.slane %v760, 1
    %v762 = vadd.f32 %v760, %v761
    %v763 = vrot.slane %v717, 4
    %v764 = vadd.f32 %v717, %v763
    %v765 = vrot.slane %v764, 2
    %v766 = vadd.f32 %v764, %v765
    %v767 = vrot.slane %v766, 1
    %v768 = vadd.f32 %v766, %v767
    %v769 = vrot.slane %v720, 4
    %v770 = vadd.f32 %v720, %v769
    %v771 = vrot.slane %v770, 2
    %v772 = vadd.f32 %v770, %v771
    %v773 = vrot.slane %v772, 1
    %v774 = vadd.f32 %v772, %v773
    %v775 = vmul.f32 %v726, 0.001953125
    %v776 = vmul.f32 %v732, 0.001953125
    %v777 = vmul.f32 %v738, 0.001953125
    %v778 = vmul.f32 %v744, 0.001953125
    %v779 = vmul.f32 %v750, 0.001953125
    %v780 = vmul.f32 %v756, 0.001953125
    %v781 = vmul.f32 %v762, 0.001953125
    %v782 = vmul.f32 %v768, 0.001953125
    %v783 = vmul.f32 %v774, 0.001953125
    %v784 = vsub.f32 %v684, %v775
    %v785 = vsub.f32 %v685, %v776
    %v786 = vsub.f32 %v686, %v777
    %v787 = vsub.f32 %v687, %v778
    %v788 = vsub.f32 %v688, %v779
    %v789 = vsub.f32 %v689, %v780
    %v790 = vsub.f32 %v690, %v781
    %v791 = vsub.f32 %v691, %v782
    %v792 = vsub.f32 %v692, %v783
    %v793 = vmul.f32 %v784, %v784
    %v794 = vmul.f32 %v785, %v785
    %v795 = vmul.f32 %v786, %v786
    %v796 = vmul.f32 %v787, %v787
    %v797 = vmul.f32 %v788, %v788
    %v798 = vmul.f32 %v789, %v789
    %v799 = vmul.f32 %v790, %v790
    %v800 = vmul.f32 %v791, %v791
    %v801 = vmul.f32 %v792, %v792
    %v802 = vsel %vm693, %v793, 0.0
    %803 = vadd.xlane.f32.xlu0 %v802
    %v804 = vpop.xlane.xlu0 %803
    %v805 = vsel %vm693, %v794, 0.0
    %806 = vadd.xlane.f32.xlu0 %v805
    %v807 = vpop.xlane.xlu0 %806
    %v808 = vsel %vm693, %v795, 0.0
    %809 = vadd.xlane.f32.xlu0 %v808
    %v810 = vpop.xlane.xlu0 %809
    %v811 = vsel %vm693, %v796, 0.0
    %812 = vadd.xlane.f32.xlu0 %v811
    %v813 = vpop.xlane.xlu0 %812
    %v814 = vsel %vm693, %v797, 0.0
    %815 = vadd.xlane.f32.xlu0 %v814
    %v816 = vpop.xlane.xlu0 %815
    %v817 = vsel %vm693, %v798, 0.0
    %818 = vadd.xlane.f32.xlu0 %v817
    %v819 = vpop.xlane.xlu0 %818
    %v820 = vsel %vm693, %v799, 0.0
    %821 = vadd.xlane.f32.xlu0 %v820
    %v822 = vpop.xlane.xlu0 %821
    %v823 = vsel %vm693, %v800, 0.0
    %824 = vadd.xlane.f32.xlu0 %v823
    %v825 = vpop.xlane.xlu0 %824
    %v826 = vsel %vm693, %v801, 0.0
    %827 = vadd.xlane.f32.xlu0 %v826
    %v828 = vpop.xlane.xlu0 %827
    %v829 = vmax.f32 %v804, 1e-24
    %v830 = vmax.f32 %v807, 1e-24
    %v831 = vmax.f32 %v810, 1e-24
    %v832 = vmax.f32 %v813, 1e-24
    %v833 = vmax.f32 %v816, 1e-24
    %v834 = vmax.f32 %v819, 1e-24
    %v835 = vmax.f32 %v822, 1e-24
    %v836 = vmax.f32 %v825, 1e-24
    %v837 = vmax.f32 %v828, 1e-24
    %v838 = vrsqrt.pop %v829
    %v839 = vmul.f32 %v838, %v829
    %v840 = vmul.f32 %v839, %v838
    %v841 = vmul.f32 0.5, %v840
    %v842 = vsub.f32 1.5, %v841
    %v843 = vmul.f32 %v838, %v842
    %vm844 = vweird.f32 %v829
    %vm845 = vweird.f32 %v838
    %vm846 = vmor %vm844, %vm845
    %v847 = vsel %vm846, %v838, %v843
    %v848 = vrsqrt.pop %v830
    %v849 = vmul.f32 %v848, %v830
    %v850 = vmul.f32 %v849, %v848
    %v851 = vmul.f32 0.5, %v850
    %v852 = vsub.f32 1.5, %v851
    %v853 = vmul.f32 %v848, %v852
    %vm854 = vweird.f32 %v830
    %vm855 = vweird.f32 %v848
    %vm856 = vmor %vm854, %vm855
    %v857 = vsel %vm856, %v848, %v853
    %v858 = vrsqrt.pop %v831
    %v859 = vmul.f32 %v858, %v831
    %v860 = vmul.f32 %v859, %v858
    %v861 = vmul.f32 0.5, %v860
    %v862 = vsub.f32 1.5, %v861
    %v863 = vmul.f32 %v858, %v862
    %vm864 = vweird.f32 %v831
    %vm865 = vweird.f32 %v858
    %vm866 = vmor %vm864, %vm865
    %v867 = vsel %vm866, %v858, %v863
    %v868 = vrsqrt.pop %v832
    %v869 = vmul.f32 %v868, %v832
    %v870 = vmul.f32 %v869, %v868
    %v871 = vmul.f32 0.5, %v870
    %v872 = vsub.f32 1.5, %v871
    %v873 = vmul.f32 %v868, %v872
    %vm874 = vweird.f32 %v832
    %vm875 = vweird.f32 %v868
    %vm876 = vmor %vm874, %vm875
    %v877 = vsel %vm876, %v868, %v873
    %v878 = vrsqrt.pop %v833
    %v879 = vmul.f32 %v878, %v833
    %v880 = vmul.f32 %v879, %v878
    %v881 = vmul.f32 0.5, %v880
    %v882 = vsub.f32 1.5, %v881
    %v883 = vmul.f32 %v878, %v882
    %vm884 = vweird.f32 %v833
    %vm885 = vweird.f32 %v878
    %vm886 = vmor %vm884, %vm885
    %v887 = vsel %vm886, %v878, %v883
    %v888 = vrsqrt.pop %v834
    %v889 = vmul.f32 %v888, %v834
    %v890 = vmul.f32 %v889, %v888
    %v891 = vmul.f32 0.5, %v890
    %v892 = vsub.f32 1.5, %v891
    %v893 = vmul.f32 %v888, %v892
    %vm894 = vweird.f32 %v834
    %vm895 = vweird.f32 %v888
    %vm896 = vmor %vm894, %vm895
    %v897 = vsel %vm896, %v888, %v893
    %v898 = vrsqrt.pop %v835
    %v899 = vmul.f32 %v898, %v835
    %v900 = vmul.f32 %v899, %v898
    %v901 = vmul.f32 0.5, %v900
    %v902 = vsub.f32 1.5, %v901
    %v903 = vmul.f32 %v898, %v902
    %vm904 = vweird.f32 %v835
    %vm905 = vweird.f32 %v898
    %vm906 = vmor %vm904, %vm905
    %v907 = vsel %vm906, %v898, %v903
    %v908 = vrsqrt.pop %v836
    %v909 = vmul.f32 %v908, %v836
    %v910 = vmul.f32 %v909, %v908
    %v911 = vmul.f32 0.5, %v910
    %v912 = vsub.f32 1.5, %v911
    %v913 = vmul.f32 %v908, %v912
    %vm914 = vweird.f32 %v836
    %vm915 = vweird.f32 %v908
    %vm916 = vmor %vm914, %vm915
    %v917 = vsel %vm916, %v908, %v913
    %v918 = vrsqrt.pop %v837
    %v919 = vmul.f32 %v918, %v837
    %v920 = vmul.f32 %v919, %v918
    %v921 = vmul.f32 0.5, %v920
    %v922 = vsub.f32 1.5, %v921
    %v923 = vmul.f32 %v918, %v922
    %vm924 = vweird.f32 %v837
    %vm925 = vweird.f32 %v918
    %vm926 = vmor %vm924, %vm925
    %v927 = vsel %vm926, %v918, %v923
    %v928 = vmul.f32 %v784, %v847
    %v929 = vmul.f32 %v785, %v857
    %v930 = vmul.f32 %v786, %v867
    %v931 = vmul.f32 %v787, %v877
    %v932 = vmul.f32 %v788, %v887
    %v933 = vmul.f32 %v789, %v897
    %v934 = vmul.f32 %v790, %v907
    %v935 = vmul.f32 %v791, %v917
    %v936 = vmul.f32 %v792, %v927
    %v937 = vsub.f32 %v928, %v934
    %v938 = vsub.f32 %v929, %v935
    %v939 = vsub.f32 %v930, %v936
    %v940 = vsub.f32 %v931, %v934
    %v941 = vsub.f32 %v932, %v935
    %v942 = vsub.f32 %v933, %v936
    %v943 = vmul.f32 %v937, %v937
    %v944 = vmul.f32 %v938, %v938
    %v945 = vmul.f32 %v939, %v939
    %v946 = vsel %vm693, %v943, 0.0
    %947 = vadd.xlane.f32.xlu0 %v946
    %v948 = vpop.xlane.xlu0 %947
    %v949 = vsel %vm693, %v944, 0.0
    %950 = vadd.xlane.f32.xlu0 %v949
    %v951 = vpop.xlane.xlu0 %950
    %v952 = vsel %vm693, %v945, 0.0
    %953 = vadd.xlane.f32.xlu0 %v952
    %v954 = vpop.xlane.xlu0 %953
    %v955 = vrot.slane %v948, 4
    %v956 = vadd.f32 %v948, %v955
    %v957 = vrot.slane %v956, 2
    %v958 = vadd.f32 %v956, %v957
    %v959 = vrot.slane %v958, 1
    %v960 = vadd.f32 %v958, %v959
    %v961 = vrot.slane %v951, 4
    %v962 = vadd.f32 %v951, %v961
    %v963 = vrot.slane %v962, 2
    %v964 = vadd.f32 %v962, %v963
    %v965 = vrot.slane %v964, 1
    %v966 = vadd.f32 %v964, %v965
    %v967 = vrot.slane %v954, 4
    %v968 = vadd.f32 %v954, %v967
    %v969 = vrot.slane %v968, 2
    %v970 = vadd.f32 %v968, %v969
    %v971 = vrot.slane %v970, 1
    %v972 = vadd.f32 %v970, %v971
    %v973 = vmul.f32 %v940, %v940
    %v974 = vmul.f32 %v941, %v941
    %v975 = vmul.f32 %v942, %v942
    %v976 = vsel %vm693, %v973, 0.0
    %977 = vadd.xlane.f32.xlu0 %v976
    %v978 = vpop.xlane.xlu0 %977
    %v979 = vsel %vm693, %v974, 0.0
    %980 = vadd.xlane.f32.xlu0 %v979
    %v981 = vpop.xlane.xlu0 %980
    %v982 = vsel %vm693, %v975, 0.0
    %983 = vadd.xlane.f32.xlu0 %v982
    %v984 = vpop.xlane.xlu0 %983
    %v985 = vrot.slane %v978, 4
    %v986 = vadd.f32 %v978, %v985
    %v987 = vrot.slane %v986, 2
    %v988 = vadd.f32 %v986, %v987
    %v989 = vrot.slane %v988, 1
    %v990 = vadd.f32 %v988, %v989
    %v991 = vrot.slane %v981, 4
    %v992 = vadd.f32 %v981, %v991
    %v993 = vrot.slane %v992, 2
    %v994 = vadd.f32 %v992, %v993
    %v995 = vrot.slane %v994, 1
    %v996 = vadd.f32 %v994, %v995
    %v997 = vrot.slane %v984, 4
    %v998 = vadd.f32 %v984, %v997
    %v999 = vrot.slane %v998, 2
    %v1000 = vadd.f32 %v998, %v999
    %v1001 = vrot.slane %v1000, 1
    %v1002 = vadd.f32 %v1000, %v1001
    %v1003 = vrsqrt.pop %v960
    %v1004 = vmul.f32 %v1003, %v960
    %v1005 = vmul.f32 %v1004, %v1003
    %v1006 = vmul.f32 0.5, %v1005
    %v1007 = vsub.f32 1.5, %v1006
    %v1008 = vmul.f32 %v1003, %v1007
    %v1009 = vmul.f32 %v960, %v1008
    %vm1010 = vcmp.eq.f32.partialorder %v960, inf
    %v1011 = vsel %vm1010, %v960, %v1009
    %vm1012 = vcmp.eq.f32.partialorder %v960, 0.0
    %v1013 = vand.u32 %v960, 2147483648
    %v1014 = vsel %vm1012, %v1013, %v1011
    %v1015 = vrsqrt.pop %v966
    %v1016 = vmul.f32 %v1015, %v966
    %v1017 = vmul.f32 %v1016, %v1015
    %v1018 = vmul.f32 0.5, %v1017
    %v1019 = vsub.f32 1.5, %v1018
    %v1020 = vmul.f32 %v1015, %v1019
    %v1021 = vmul.f32 %v966, %v1020
    %vm1022 = vcmp.eq.f32.partialorder %v966, inf
    %v1023 = vsel %vm1022, %v966, %v1021
    %vm1024 = vcmp.eq.f32.partialorder %v966, 0.0
    %v1025 = vand.u32 %v966, 2147483648
    %v1026 = vsel %vm1024, %v1025, %v1023
    %v1027 = vrsqrt.pop %v972
    %v1028 = vmul.f32 %v1027, %v972
    %v1029 = vmul.f32 %v1028, %v1027
    %v1030 = vmul.f32 0.5, %v1029
    %v1031 = vsub.f32 1.5, %v1030
    %v1032 = vmul.f32 %v1027, %v1031
    %v1033 = vmul.f32 %v972, %v1032
    %vm1034 = vcmp.eq.f32.partialorder %v972, inf
    %v1035 = vsel %vm1034, %v972, %v1033
    %vm1036 = vcmp.eq.f32.partialorder %v972, 0.0
    %v1037 = vand.u32 %v972, 2147483648
    %v1038 = vsel %vm1036, %v1037, %v1035
    %vm1039 = vcmask 0
    %v1040 = vsel %vm1039, %v1014, 0.0
    %v1041 = vsel %vm1039, %v1026, 0.0
    %v1042 = vadd.f32 %v1040, %v1041
    %v1043 = vsel %vm1039, %v1038, 0.0
    %v1044 = vadd.f32 %v1042, %v1043
    %1045 = vadd.xlane.f32.xlu0 %v1044
    %v1046 = vpop.xlane.xlu0 %1045
    %v1047 = vrot.slane %v1046, 4
    %v1048 = vadd.f32 %v1046, %v1047
    %v1049 = vrot.slane %v1048, 2
    %v1050 = vadd.f32 %v1048, %v1049
    %v1051 = vrot.slane %v1050, 1
    %v1052 = vadd.f32 %v1050, %v1051
    %s1053 = vtos %v1052
    %v1054 = vrsqrt.pop %v990
    %v1055 = vmul.f32 %v1054, %v990
    %v1056 = vmul.f32 %v1055, %v1054
    %v1057 = vmul.f32 0.5, %v1056
    %v1058 = vsub.f32 1.5, %v1057
    %v1059 = vmul.f32 %v1054, %v1058
    %v1060 = vmul.f32 %v990, %v1059
    %vm1061 = vcmp.eq.f32.partialorder %v990, inf
    %v1062 = vsel %vm1061, %v990, %v1060
    %vm1063 = vcmp.eq.f32.partialorder %v990, 0.0
    %v1064 = vand.u32 %v990, 2147483648
    %v1065 = vsel %vm1063, %v1064, %v1062
    %v1066 = vrsqrt.pop %v996
    %v1067 = vmul.f32 %v1066, %v996
    %v1068 = vmul.f32 %v1067, %v1066
    %v1069 = vmul.f32 0.5, %v1068
    %v1070 = vsub.f32 1.5, %v1069
    %v1071 = vmul.f32 %v1066, %v1070
    %v1072 = vmul.f32 %v996, %v1071
    %vm1073 = vcmp.eq.f32.partialorder %v996, inf
    %v1074 = vsel %vm1073, %v996, %v1072
    %vm1075 = vcmp.eq.f32.partialorder %v996, 0.0
    %v1076 = vand.u32 %v996, 2147483648
    %v1077 = vsel %vm1075, %v1076, %v1074
    %v1078 = vrsqrt.pop %v1002
    %v1079 = vmul.f32 %v1078, %v1002
    %v1080 = vmul.f32 %v1079, %v1078
    %v1081 = vmul.f32 0.5, %v1080
    %v1082 = vsub.f32 1.5, %v1081
    %v1083 = vmul.f32 %v1078, %v1082
    %v1084 = vmul.f32 %v1002, %v1083
    %vm1085 = vcmp.eq.f32.partialorder %v1002, inf
    %v1086 = vsel %vm1085, %v1002, %v1084
    %vm1087 = vcmp.eq.f32.partialorder %v1002, 0.0
    %v1088 = vand.u32 %v1002, 2147483648
    %v1089 = vsel %vm1087, %v1088, %v1086
    %v1090 = vsel %vm1039, %v1065, 0.0
    %v1091 = vsel %vm1039, %v1077, 0.0
    %v1092 = vadd.f32 %v1090, %v1091
    %v1093 = vsel %vm1039, %v1089, 0.0
    %v1094 = vadd.f32 %v1092, %v1093
    %1095 = vadd.xlane.f32.xlu0 %v1094
    %v1096 = vpop.xlane.xlu0 %1095
    %v1097 = vrot.slane %v1096, 4
    %v1098 = vadd.f32 %v1096, %v1097
    %v1099 = vrot.slane %v1098, 2
    %v1100 = vadd.f32 %v1098, %v1099
    %v1101 = vrot.slane %v1100, 1
    %v1102 = vadd.f32 %v1100, %v1101
    %s1103 = vtos %v1102
    %s1104 = sadd.f32 %s1053, %s1103
    %s1105 = sadd.f32 %s248, %s683
    %s1106 = smul.f32 %s1104, 0.7
    %s1107 = sadd.f32 %s1105, %s1106
    %s1108 = scalar_lea.smem [#allocation8], 0
    %1109 = sst [smem:[%s1108]] %s1107
    // Predicated region
    $region26: #{tpu_custom_call.1} parent=1 // pred_check
      _
    $region27: #{tpu_custom_call.1} parent=1 // pred_check_branch
      %1111 = sbr.rel (0) target = $region29
    $region28: #{tpu_custom_call.1} parent=1 // pred_region
      %1113 = vsyncadd [#allocation4], 0
      %s1115 = sshll.u32 %s3, 4
      %s1116 = int_to_ptr.hbm [resolvable:$true] %s1115
      %1118 = dma.smem_to_hbm [#allocation8], 16, %s1116, [#allocation4]
    $region29: #{tpu_custom_call.1} parent=1 // pred_fallthru
      _
    // Predicated region
    $region30: #{tpu_custom_call.1} parent=1 // pred_check
      _
    $region31: #{tpu_custom_call.1} parent=1 // pred_check_branch
      %1120 = sbr.rel (0) target = $region33
    $region32: #{tpu_custom_call.1} parent=1 // pred_region
      %1122 = dma.done [#allocation4], 16
    $region33: #{tpu_custom_call.1} parent=1 // pred_fallthru
      _
    %1123 = sfence
    %1124 = vsyncpa [#allocation3], 1
    %1125 = vsyncpa [#allocation6], 1
    %1126 = vsyncpa [#allocation4], 1

</llo_original>
